<compile_context>
chip_gen: v6e
topology: v6e:2x2x1
jax: 0.10.0
libtpu: 0.0.40
codegen_flags: <defaults>
</compile_context>

<pallas_src>
import functools

import jax
import jax.numpy as jnp
import numpy as np
from jax import lax
from jax.experimental import pallas as pl
from jax.experimental.pallas import tpu as pltpu


# ----------------------------------------------------------------------------
# Fused graph-conv stack kernel (whole problem resident, single grid step)
# ----------------------------------------------------------------------------
def _fused_gcn_kernel(x0_ref, a_ref, wcat_ref, bcat_ref, out_ref, *,
                      relu_flags, latent_idx, latent_width):
  """Runs every GraphConv layer with the (B*N, 128) activation on-chip.

  x0:   (M, 128)        f32  lane-dense input slab
        [sampled | extra | prev-latent | 0.. | vertices@LW:LW+3 | 0..]
  a:    (M, M)          bf16 block-diagonal row-normalized adjacency (A/deg)
  wcat: (L, 256, 128)   bf16 per-layer stacked [Ws; Wn] (zero padded)
  bcat: (L, 1, 128)     f32  per-layer bs+bn (zero padded)
  out:  (M, 128)        f32  [latent(0:LW) | new_vertices(LW:LW+3) | 0..]
  """
  x0 = x0_ref[...]                                   # (M, 128) f32
  a = a_ref[...]                                     # (M, M)   bf16
  x = x0
  latent = None
  for l, relu in enumerate(relu_flags):              # static unrolled layers
    xb = x.astype(jnp.bfloat16)
    neigh = jnp.dot(a, xb,
                    preferred_element_type=jnp.float32).astype(jnp.bfloat16)
    xcat = jnp.concatenate([xb, neigh], axis=-1)     # (M, 256) bf16, K=256
    y = (jnp.dot(xcat, wcat_ref[l], preferred_element_type=jnp.float32)
         + bcat_ref[l])
    if relu:
      y = jnp.maximum(y, 0.0)
    if l == latent_idx:
      latent = y                                     # lanes >= LW exactly 0
    x = y
  # Final activation is non-zero only at lanes [LW, LW+3) (deltaV); latent is
  # non-zero only at lanes [0, LW); vertices sit at lanes [LW, LW+3) of x0.
  lane = lax.broadcasted_iota(jnp.int32, x.shape, 1)
  vmask = (lane >= latent_width) & (lane < latent_width + 3)
  out_ref[...] = latent + x + jnp.where(vmask, x0, 0.0)   # one lane-dense store


# ----------------------------------------------------------------------------
# Trilinear sampling: 8-corner whole-row gather + weighted sum
# ----------------------------------------------------------------------------
# TODO(synk): the data-dependent gather has no clean BlockSpec expression; it
# stays in plain JAX (XLA row-gather). For small volumes (V <= ~2K) it could be
# fused into the Pallas kernel as 8 one-hot (B*N, B*V)@(B*V, 128) MXU matmuls.
def trilinear_sample(vertices, vol_feats):
  """vertices: (B,N,3) in [-1,1] ordered (x,y,z); vol_feats: (B,C,Dz,Hy,Wx).

  Matches F.grid_sample(mode='bilinear', padding_mode='zeros',
  align_corners=True) evaluated at the vertices. Returns (B, N, C)."""
  B, C, Dz, Hy, Wx = vol_feats.shape
  V = Dz * Hy * Wx
  feat_flat = vol_feats.reshape(B, C, V).transpose(0, 2, 1)      # (B, V, C)
  gx = (vertices[..., 0] + 1.0) * 0.5 * (Wx - 1)
  gy = (vertices[..., 1] + 1.0) * 0.5 * (Hy - 1)
  gz = (vertices[..., 2] + 1.0) * 0.5 * (Dz - 1)
  x0 = jnp.floor(gx); y0 = jnp.floor(gy); z0 = jnp.floor(gz)
  tx, ty, tz = gx - x0, gy - y0, gz - z0
  bidx = jnp.arange(B)[:, None]                                  # (B, 1)
  out = jnp.zeros((B, vertices.shape[1], C), jnp.float32)
  for dz in (0, 1):
    wz = tz if dz else 1.0 - tz
    for dy in (0, 1):
      wy = ty if dy else 1.0 - ty
      for dx in (0, 1):
        wx_ = tx if dx else 1.0 - tx
        xi, yi, zi = x0 + dx, y0 + dy, z0 + dz
        valid = ((xi >= 0) & (xi < Wx) & (yi >= 0) & (yi < Hy) &
                 (zi >= 0) & (zi < Dz))
        flat = (jnp.clip(zi, 0, Dz - 1).astype(jnp.int32) * (Hy * Wx)
                + jnp.clip(yi, 0, Hy - 1).astype(jnp.int32) * Wx
                + jnp.clip(xi, 0, Wx - 1).astype(jnp.int32))     # (B, N)
        gathered = feat_flat[bidx, flat]                         # (B, N, C) rows
        w = (wz * wy * wx_ * valid.astype(jnp.float32))[..., None]
        out = out + w * gathered
  return out


# ----------------------------------------------------------------------------
# Parameters (deterministic init, PyTorch nn.Linear-style uniform)
# ----------------------------------------------------------------------------
def _linear_params(key, fan_in, fan_out):
  k1, k2 = jax.random.split(key)
  bound = 1.0 / np.sqrt(fan_in)
  W = jax.random.uniform(k1, (fan_in, fan_out), jnp.float32, -bound, bound)
  b = jax.random.uniform(k2, (1, fan_out), jnp.float32, -bound, bound)
  return W, b


def _graph_conv_params(key, fin, fout):
  k1, k2 = jax.random.split(key)
  Ws, bs = _linear_params(k1, fin, fout)
  Wn, bn = _linear_params(k2, fin, fout)
  return (Ws, bs, Wn, bn)


def init_mat_deform_params(key, skip_amount, latent_features_count,
                           graph_conv_layer_count,
                           previous_latent_features_count=0):
  keys = jax.random.split(key, 16)
  # LearntNeighbourhoodSampling extra-channel linear.
  w_extra, b_extra = _linear_params(keys[0], skip_amount, 1)
  # Features2Features.
  f2f_in = skip_amount + previous_latent_features_count + 4
  F = latent_features_count
  f2f = [_graph_conv_params(keys[1], f2f_in, F)]
  for i in range(graph_conv_layer_count):
    f2f.append(_graph_conv_params(keys[2 + i], F, F))
  f2f.append(_graph_conv_params(keys[2 + graph_conv_layer_count], F, F))
  # Feature2VertexLayer(F, hidden_layer_count=3).
  hlc = 3
  f2v = []
  koff = 3 + graph_conv_layer_count
  for j, i in enumerate(range(hlc, 1, -1)):
    fin = i * F // hlc
    fout = (i - 1) * F // hlc
    f2v.append(_graph_conv_params(keys[koff + j], fin, fout))
  f2v.append(_graph_conv_params(keys[koff + hlc - 1], F // hlc, 3))
  return {"skip": (w_extra, b_extra), "f2f": tuple(f2f), "f2v": tuple(f2v)}


def prepare_fused_params(params, *, skip_amount, latent_features_count,
                         previous_latent_features_count=0, f_pad=128):
  """Pack all GraphConv weights into lane-dense stacked slabs.

  Per layer, rows 0:f_pad hold Ws and rows f_pad:2*f_pad hold Wn (zero padded)
  so one K=2*f_pad matmul on [x | neigh] does both paths; biases are pre-summed.
  Layer-0 weight rows are permuted to the kernel's x0 column layout (vertices
  live at lanes LW:LW+3) and the last layer's output columns are placed at
  LW:LW+3 so deltaV lands on the vertex lanes of the output slab."""
  S = skip_amount
  P = previous_latent_features_count
  LW = latent_features_count
  assert S + 1 + P <= LW, "input columns would collide with the vertex lanes"
  assert LW + 3 <= f_pad
  layers = list(params["f2f"]) + list(params["f2v"])
  L = len(layers)
  n_f2f, n_f2v = len(params["f2f"]), len(params["f2v"])

  w_cat = np.zeros((L, 2 * f_pad, f_pad), np.float32)
  b_cat = np.zeros((L, 1, f_pad), np.float32)

  # x0 column layout: sampled->0:S, extra->S, prev-latent->S+1:S+1+P,
  # vertices->LW:LW+3.  Reference concat order is [prev-latent, sampled,
  # extra, vertices] -> permute layer-0 weight rows.
  fin0 = P + S + 4
  perm0 = np.zeros(fin0, np.int64)
  perm0[0:P] = S + 1 + np.arange(P)
  perm0[P:P + S] = np.arange(S)
  perm0[P + S] = S
  perm0[P + S + 1:P + S + 4] = LW + np.arange(3)

  for l, (Ws, bs, Wn, bn) in enumerate(layers):
    Ws, bs = np.asarray(Ws, np.float32), np.asarray(bs, np.float32)
    Wn, bn = np.asarray(Wn, np.float32), np.asarray(bn, np.float32)
    fin, fout = Ws.shape
    rows = perm0 if l == 0 else np.arange(fin)
    col = LW if l == L - 1 else 0          # final deltaV at lanes LW:LW+3
    w_cat[l, rows, col:col + fout] = Ws
    w_cat[l, f_pad + rows, col:col + fout] = Wn
    b_cat[l, 0, col:col + fout] = (bs + bn)[0]

  prepared = {
      "w_extra": params["skip"][0], "b_extra": params["skip"][1],
      "w_cat": jnp.asarray(w_cat, jnp.bfloat16),
      "b_cat": jnp.asarray(b_cat, jnp.float32),
  }
  meta = dict(
      relu_flags=tuple([True] * (n_f2f - 1) + [False]
                       + [True] * (n_f2v - 1) + [False]),
      latent_idx=n_f2f - 1,
      latent_width=LW,
      f_pad=f_pad)
  return prepared, meta


# ----------------------------------------------------------------------------
# MATDeform forward
# ----------------------------------------------------------------------------
def mat_deform_forward(prepared, vertices, voxel_decoder_features, A, inv_deg,
                       *, skip_amount, relu_flags, latent_idx, latent_width,
                       f_pad, latent_features=None):
  B, N, _ = vertices.shape
  M = B * N
  L = prepared["w_cat"].shape[0]
  S = skip_amount
  LW = latent_width
  P = 0 if latent_features is None else latent_features.shape[-1]

  # --- skip_connection (LearntNeighbourhoodSampling) ---
  sampled = trilinear_sample(vertices, voxel_decoder_features[:, :S])     # (B,N,S)
  extra = jnp.dot(sampled, prepared["w_extra"]) + prepared["b_extra"]     # (B,N,1)

  # --- lane-dense input slab (B*N, f_pad) ---
  pieces = [sampled, extra]
  if latent_features is not None:
    pieces.append(latent_features)
  pieces.append(jnp.zeros((B, N, LW - (S + 1 + P)), jnp.float32))
  pieces.append(vertices)                                                 # lanes LW:LW+3
  pieces.append(jnp.zeros((B, N, f_pad - LW - 3), jnp.float32))
  x0 = jnp.concatenate(pieces, axis=-1).reshape(M, f_pad)

  # --- block-diagonal row-normalized adjacency (1/deg folded in f32, then bf16) ---
  a_norm = A * inv_deg                                                    # (N,N) f32
  a_bd = jnp.kron(jnp.eye(B, dtype=a_norm.dtype), a_norm).astype(jnp.bfloat16)

  kernel = functools.partial(_fused_gcn_kernel, relu_flags=relu_flags,
                             latent_idx=latent_idx, latent_width=LW)
  out_slab = pl.pallas_call(
      kernel,
      out_shape=jax.ShapeDtypeStruct((M, f_pad), jnp.float32),
      grid=(1,),
      in_specs=[
          pl.BlockSpec((M, f_pad), lambda i: (0, 0)),              # x0 slab
          pl.BlockSpec((M, M), lambda i: (0, 0)),                  # adjacency
          pl.BlockSpec((L, 2 * f_pad, f_pad), lambda i: (0, 0, 0)),  # [Ws;Wn]
          pl.BlockSpec((L, 1, f_pad), lambda i: (0, 0, 0)),        # bs+bn
      ],
      out_specs=pl.BlockSpec((M, f_pad), lambda i: (0, 0)),
      compiler_params=pltpu.CompilerParams(
          dimension_semantics=("arbitrary",)),
  )(x0, a_bd, prepared["w_cat"], prepared["b_cat"])

  latent = out_slab[:, :LW].reshape(B, N, LW)
  new_vertices = out_slab[:, LW:LW + 3].reshape(B, N, 3)
  return new_vertices, latent


# ----------------------------------------------------------------------------
# Main
# ----------------------------------------------------------------------------
if __name__ == "__main__":
  key = jax.random.PRNGKey(0)
  kv, kf, kp = jax.random.split(key, 3)

  # Config (small, consistent with the module's forward).
  B, N = 2, 64                      # batch, mesh vertices (B*N = 128 = MXU M)
  SKIP_AMOUNT = 4
  C_TOTAL = 8                       # voxel decoder channels (>= skip_amount)
  VOL = (8, 8, 8)                   # (D, H, W) voxel patch
  LATENT_F = 32                     # latent_features_count
  GRAPH_CONV_LAYERS = 2             # config.graph_conv_layer_count
  F_PAD = 128                       # lane-dense padded feature width

  vertices = jax.random.uniform(kv, (B, N, 3), jnp.float32, -0.9, 0.9)
  voxel_decoder_features = jax.random.normal(
      kf, (B, C_TOTAL) + VOL, jnp.float32)

  # Ring adjacency (each vertex connected to i+-1, i+-2) and degree.
  idx = np.arange(N)
  A_np = np.zeros((N, N), np.float32)
  for off in (1, 2):
    A_np[idx, (idx + off) % N] = 1.0
    A_np[idx, (idx - off) % N] = 1.0
  A = jnp.asarray(A_np)
  deg = jnp.maximum(A.sum(axis=1, keepdims=True), 1.0)   # f32, before bf16 cast
  inv_deg = 1.0 / deg                                    # (N, 1)

  params = init_mat_deform_params(
      kp, SKIP_AMOUNT, LATENT_F, GRAPH_CONV_LAYERS,
      previous_latent_features_count=0)
  prepared, meta = prepare_fused_params(
      params, skip_amount=SKIP_AMOUNT, latent_features_count=LATENT_F,
      previous_latent_features_count=0, f_pad=F_PAD)

  fwd = jax.jit(functools.partial(mat_deform_forward, skip_amount=SKIP_AMOUNT,
                                  latent_features=None, **meta))
  new_vertices, latent_features = fwd(prepared, vertices,
                                      voxel_decoder_features, A, inv_deg)
  jax.block_until_ready((new_vertices, latent_features))

  assert new_vertices.shape == (B, N, 3)
  assert latent_features.shape == (B, N, LATENT_F)
  assert bool(jnp.isfinite(new_vertices).all())
  assert bool(jnp.isfinite(latent_features).all())
  print("KERNEL_OK")
</pallas_src>

<mosaic_0001>
module attributes {stable_mosaic.version = 11 : i64} {
  func.func @_fused_gcn_kernel(%arg0: i32, %arg1: memref<128x128xf32, #tpu.memory_space<vmem>>, %arg2: memref<128x128xbf16, #tpu.memory_space<vmem>>, %arg3: memref<7x256x128xbf16, #tpu.memory_space<vmem>>, %arg4: memref<7x1x128xf32, #tpu.memory_space<vmem>>, %arg5: memref<128x128xf32, #tpu.memory_space<vmem>>) attributes {dimension_semantics = [#tpu.dimension_semantics<arbitrary>], iteration_bounds = array<i64: 1>, scalar_prefetch = 0 : i64, scratch_operands = 0 : i64, tpu.core_type = #tpu.core_type<tc>, window_params = [{pipeline_mode = #tpu.pipeline_mode<synchronous>, transform_indices = @transform_0, window_bounds = array<i64: 128, 128>}, {pipeline_mode = #tpu.pipeline_mode<synchronous>, transform_indices = @transform_1, window_bounds = array<i64: 128, 128>}, {pipeline_mode = #tpu.pipeline_mode<synchronous>, transform_indices = @transform_2, window_bounds = array<i64: 7, 256, 128>}, {pipeline_mode = #tpu.pipeline_mode<synchronous>, transform_indices = @transform_3, window_bounds = array<i64: 7, 1, 128>}, {pipeline_mode = #tpu.pipeline_mode<synchronous>, transform_indices = @transform_4, window_bounds = array<i64: 128, 128>}]} {
    %c0 = arith.constant 0 : index
    %c0_0 = arith.constant 0 : index
    %0 = vector.load %arg1[%c0, %c0_0] : memref<128x128xf32, #tpu.memory_space<vmem>>, vector<128x128xf32>
    %c0_1 = arith.constant 0 : index
    %c0_2 = arith.constant 0 : index
    %1 = vector.load %arg2[%c0_1, %c0_2] : memref<128x128xbf16, #tpu.memory_space<vmem>>, vector<128x128xbf16>
    %2 = arith.truncf %0 : vector<128x128xf32> to vector<128x128xbf16>
    %cst = arith.constant dense<0.000000e+00> : vector<128x128xf32>
    %3 = tpu.matmul %1, %2, %cst {dimension_numbers = #tpu.dot_dimension_numbers<[1], [0], [0], [1], [0, 0, 1, 1], [], []>} : vector<128x128xbf16>, vector<128x128xbf16>, vector<128x128xf32> -> vector<128x128xf32>
    %4 = arith.truncf %3 : vector<128x128xf32> to vector<128x128xbf16>
    %5 = tpu.concatenate %2, %4 in 1 : vector<128x128xbf16>, vector<128x128xbf16> -> vector<128x256xbf16>
    %c0_3 = arith.constant 0 : index
    %c0_4 = arith.constant 0 : index
    %c0_5 = arith.constant 0 : index
    %6 = vector.load %arg3[%c0_3, %c0_4, %c0_5] : memref<7x256x128xbf16, #tpu.memory_space<vmem>>, vector<1x256x128xbf16>
    %7 = vector.shape_cast %6 : vector<1x256x128xbf16> to vector<256x128xbf16>
    %cst_6 = arith.constant dense<0.000000e+00> : vector<128x128xf32>
    %8 = tpu.matmul %5, %7, %cst_6 {dimension_numbers = #tpu.dot_dimension_numbers<[1], [0], [0], [1], [0, 0, 1, 1], [], []>} : vector<128x256xbf16>, vector<256x128xbf16>, vector<128x128xf32> -> vector<128x128xf32>
    %c0_7 = arith.constant 0 : index
    %c0_8 = arith.constant 0 : index
    %c0_9 = arith.constant 0 : index
    %9 = vector.load %arg4[%c0_7, %c0_8, %c0_9] : memref<7x1x128xf32, #tpu.memory_space<vmem>>, vector<1x1x128xf32>
    %10 = vector.shape_cast %9 : vector<1x1x128xf32> to vector<1x128xf32>
    %11 = vector.broadcast %10 : vector<1x128xf32> to vector<128x128xf32>
    %12 = arith.addf %8, %11 : vector<128x128xf32>
    %cst_10 = arith.constant 0.000000e+00 : f32
    %13 = vector.broadcast %cst_10 : f32 to vector<128x128xf32>
    %14 = arith.maximumf %12, %13 : vector<128x128xf32>
    %15 = arith.truncf %14 : vector<128x128xf32> to vector<128x128xbf16>
    %cst_11 = arith.constant dense<0.000000e+00> : vector<128x128xf32>
    %16 = tpu.matmul %1, %15, %cst_11 {dimension_numbers = #tpu.dot_dimension_numbers<[1], [0], [0], [1], [0, 0, 1, 1], [], []>} : vector<128x128xbf16>, vector<128x128xbf16>, vector<128x128xf32> -> vector<128x128xf32>
    %17 = arith.truncf %16 : vector<128x128xf32> to vector<128x128xbf16>
    %18 = tpu.concatenate %15, %17 in 1 : vector<128x128xbf16>, vector<128x128xbf16> -> vector<128x256xbf16>
    %c1 = arith.constant 1 : index
    %c0_12 = arith.constant 0 : index
    %c0_13 = arith.constant 0 : index
    %19 = vector.load %arg3[%c1, %c0_12, %c0_13] : memref<7x256x128xbf16, #tpu.memory_space<vmem>>, vector<1x256x128xbf16>
    %20 = vector.shape_cast %19 : vector<1x256x128xbf16> to vector<256x128xbf16>
    %cst_14 = arith.constant dense<0.000000e+00> : vector<128x128xf32>
    %21 = tpu.matmul %18, %20, %cst_14 {dimension_numbers = #tpu.dot_dimension_numbers<[1], [0], [0], [1], [0, 0, 1, 1], [], []>} : vector<128x256xbf16>, vector<256x128xbf16>, vector<128x128xf32> -> vector<128x128xf32>
    %c1_15 = arith.constant 1 : index
    %c0_16 = arith.constant 0 : index
    %c0_17 = arith.constant 0 : index
    %22 = vector.load %arg4[%c1_15, %c0_16, %c0_17] : memref<7x1x128xf32, #tpu.memory_space<vmem>>, vector<1x1x128xf32>
    %23 = vector.shape_cast %22 : vector<1x1x128xf32> to vector<1x128xf32>
    %24 = vector.broadcast %23 : vector<1x128xf32> to vector<128x128xf32>
    %25 = arith.addf %21, %24 : vector<128x128xf32>
    %cst_18 = arith.constant 0.000000e+00 : f32
    %26 = vector.broadcast %cst_18 : f32 to vector<128x128xf32>
    %27 = arith.maximumf %25, %26 : vector<128x128xf32>
    %28 = arith.truncf %27 : vector<128x128xf32> to vector<128x128xbf16>
    %cst_19 = arith.constant dense<0.000000e+00> : vector<128x128xf32>
    %29 = tpu.matmul %1, %28, %cst_19 {dimension_numbers = #tpu.dot_dimension_numbers<[1], [0], [0], [1], [0, 0, 1, 1], [], []>} : vector<128x128xbf16>, vector<128x128xbf16>, vector<128x128xf32> -> vector<128x128xf32>
    %30 = arith.truncf %29 : vector<128x128xf32> to vector<128x128xbf16>
    %31 = tpu.concatenate %28, %30 in 1 : vector<128x128xbf16>, vector<128x128xbf16> -> vector<128x256xbf16>
    %c2 = arith.constant 2 : index
    %c0_20 = arith.constant 0 : index
    %c0_21 = arith.constant 0 : index
    %32 = vector.load %arg3[%c2, %c0_20, %c0_21] : memref<7x256x128xbf16, #tpu.memory_space<vmem>>, vector<1x256x128xbf16>
    %33 = vector.shape_cast %32 : vector<1x256x128xbf16> to vector<256x128xbf16>
    %cst_22 = arith.constant dense<0.000000e+00> : vector<128x128xf32>
    %34 = tpu.matmul %31, %33, %cst_22 {dimension_numbers = #tpu.dot_dimension_numbers<[1], [0], [0], [1], [0, 0, 1, 1], [], []>} : vector<128x256xbf16>, vector<256x128xbf16>, vector<128x128xf32> -> vector<128x128xf32>
    %c2_23 = arith.constant 2 : index
    %c0_24 = arith.constant 0 : index
    %c0_25 = arith.constant 0 : index
    %35 = vector.load %arg4[%c2_23, %c0_24, %c0_25] : memref<7x1x128xf32, #tpu.memory_space<vmem>>, vector<1x1x128xf32>
    %36 = vector.shape_cast %35 : vector<1x1x128xf32> to vector<1x128xf32>
    %37 = vector.broadcast %36 : vector<1x128xf32> to vector<128x128xf32>
    %38 = arith.addf %34, %37 : vector<128x128xf32>
    %cst_26 = arith.constant 0.000000e+00 : f32
    %39 = vector.broadcast %cst_26 : f32 to vector<128x128xf32>
    %40 = arith.maximumf %38, %39 : vector<128x128xf32>
    %41 = arith.truncf %40 : vector<128x128xf32> to vector<128x128xbf16>
    %cst_27 = arith.constant dense<0.000000e+00> : vector<128x128xf32>
    %42 = tpu.matmul %1, %41, %cst_27 {dimension_numbers = #tpu.dot_dimension_numbers<[1], [0], [0], [1], [0, 0, 1, 1], [], []>} : vector<128x128xbf16>, vector<128x128xbf16>, vector<128x128xf32> -> vector<128x128xf32>
    %43 = arith.truncf %42 : vector<128x128xf32> to vector<128x128xbf16>
    %44 = tpu.concatenate %41, %43 in 1 : vector<128x128xbf16>, vector<128x128xbf16> -> vector<128x256xbf16>
    %c3 = arith.constant 3 : index
    %c0_28 = arith.constant 0 : index
    %c0_29 = arith.constant 0 : index
    %45 = vector.load %arg3[%c3, %c0_28, %c0_29] : memref<7x256x128xbf16, #tpu.memory_space<vmem>>, vector<1x256x128xbf16>
    %46 = vector.shape_cast %45 : vector<1x256x128xbf16> to vector<256x128xbf16>
    %cst_30 = arith.constant dense<0.000000e+00> : vector<128x128xf32>
    %47 = tpu.matmul %44, %46, %cst_30 {dimension_numbers = #tpu.dot_dimension_numbers<[1], [0], [0], [1], [0, 0, 1, 1], [], []>} : vector<128x256xbf16>, vector<256x128xbf16>, vector<128x128xf32> -> vector<128x128xf32>
    %c3_31 = arith.constant 3 : index
    %c0_32 = arith.constant 0 : index
    %c0_33 = arith.constant 0 : index
    %48 = vector.load %arg4[%c3_31, %c0_32, %c0_33] : memref<7x1x128xf32, #tpu.memory_space<vmem>>, vector<1x1x128xf32>
    %49 = vector.shape_cast %48 : vector<1x1x128xf32> to vector<1x128xf32>
    %50 = vector.broadcast %49 : vector<1x128xf32> to vector<128x128xf32>
    %51 = arith.addf %47, %50 : vector<128x128xf32>
    %52 = arith.truncf %51 : vector<128x128xf32> to vector<128x128xbf16>
    %cst_34 = arith.constant dense<0.000000e+00> : vector<128x128xf32>
    %53 = tpu.matmul %1, %52, %cst_34 {dimension_numbers = #tpu.dot_dimension_numbers<[1], [0], [0], [1], [0, 0, 1, 1], [], []>} : vector<128x128xbf16>, vector<128x128xbf16>, vector<128x128xf32> -> vector<128x128xf32>
    %54 = arith.truncf %53 : vector<128x128xf32> to vector<128x128xbf16>
    %55 = tpu.concatenate %52, %54 in 1 : vector<128x128xbf16>, vector<128x128xbf16> -> vector<128x256xbf16>
    %c4 = arith.constant 4 : index
    %c0_35 = arith.constant 0 : index
    %c0_36 = arith.constant 0 : index
    %56 = vector.load %arg3[%c4, %c0_35, %c0_36] : memref<7x256x128xbf16, #tpu.memory_space<vmem>>, vector<1x256x128xbf16>
    %57 = vector.shape_cast %56 : vector<1x256x128xbf16> to vector<256x128xbf16>
    %cst_37 = arith.constant dense<0.000000e+00> : vector<128x128xf32>
    %58 = tpu.matmul %55, %57, %cst_37 {dimension_numbers = #tpu.dot_dimension_numbers<[1], [0], [0], [1], [0, 0, 1, 1], [], []>} : vector<128x256xbf16>, vector<256x128xbf16>, vector<128x128xf32> -> vector<128x128xf32>
    %c4_38 = arith.constant 4 : index
    %c0_39 = arith.constant 0 : index
    %c0_40 = arith.constant 0 : index
    %59 = vector.load %arg4[%c4_38, %c0_39, %c0_40] : memref<7x1x128xf32, #tpu.memory_space<vmem>>, vector<1x1x128xf32>
    %60 = vector.shape_cast %59 : vector<1x1x128xf32> to vector<1x128xf32>
    %61 = vector.broadcast %60 : vector<1x128xf32> to vector<128x128xf32>
    %62 = arith.addf %58, %61 : vector<128x128xf32>
    %cst_41 = arith.constant 0.000000e+00 : f32
    %63 = vector.broadcast %cst_41 : f32 to vector<128x128xf32>
    %64 = arith.maximumf %62, %63 : vector<128x128xf32>
    %65 = arith.truncf %64 : vector<128x128xf32> to vector<128x128xbf16>
    %cst_42 = arith.constant dense<0.000000e+00> : vector<128x128xf32>
    %66 = tpu.matmul %1, %65, %cst_42 {dimension_numbers = #tpu.dot_dimension_numbers<[1], [0], [0], [1], [0, 0, 1, 1], [], []>} : vector<128x128xbf16>, vector<128x128xbf16>, vector<128x128xf32> -> vector<128x128xf32>
    %67 = arith.truncf %66 : vector<128x128xf32> to vector<128x128xbf16>
    %68 = tpu.concatenate %65, %67 in 1 : vector<128x128xbf16>, vector<128x128xbf16> -> vector<128x256xbf16>
    %c5 = arith.constant 5 : index
    %c0_43 = arith.constant 0 : index
    %c0_44 = arith.constant 0 : index
    %69 = vector.load %arg3[%c5, %c0_43, %c0_44] : memref<7x256x128xbf16, #tpu.memory_space<vmem>>, vector<1x256x128xbf16>
    %70 = vector.shape_cast %69 : vector<1x256x128xbf16> to vector<256x128xbf16>
    %cst_45 = arith.constant dense<0.000000e+00> : vector<128x128xf32>
    %71 = tpu.matmul %68, %70, %cst_45 {dimension_numbers = #tpu.dot_dimension_numbers<[1], [0], [0], [1], [0, 0, 1, 1], [], []>} : vector<128x256xbf16>, vector<256x128xbf16>, vector<128x128xf32> -> vector<128x128xf32>
    %c5_46 = arith.constant 5 : index
    %c0_47 = arith.constant 0 : index
    %c0_48 = arith.constant 0 : index
    %72 = vector.load %arg4[%c5_46, %c0_47, %c0_48] : memref<7x1x128xf32, #tpu.memory_space<vmem>>, vector<1x1x128xf32>
    %73 = vector.shape_cast %72 : vector<1x1x128xf32> to vector<1x128xf32>
    %74 = vector.broadcast %73 : vector<1x128xf32> to vector<128x128xf32>
    %75 = arith.addf %71, %74 : vector<128x128xf32>
    %cst_49 = arith.constant 0.000000e+00 : f32
    %76 = vector.broadcast %cst_49 : f32 to vector<128x128xf32>
    %77 = arith.maximumf %75, %76 : vector<128x128xf32>
    %78 = arith.truncf %77 : vector<128x128xf32> to vector<128x128xbf16>
    %cst_50 = arith.constant dense<0.000000e+00> : vector<128x128xf32>
    %79 = tpu.matmul %1, %78, %cst_50 {dimension_numbers = #tpu.dot_dimension_numbers<[1], [0], [0], [1], [0, 0, 1, 1], [], []>} : vector<128x128xbf16>, vector<128x128xbf16>, vector<128x128xf32> -> vector<128x128xf32>
    %80 = arith.truncf %79 : vector<128x128xf32> to vector<128x128xbf16>
    %81 = tpu.concatenate %78, %80 in 1 : vector<128x128xbf16>, vector<128x128xbf16> -> vector<128x256xbf16>
    %c6 = arith.constant 6 : index
    %c0_51 = arith.constant 0 : index
    %c0_52 = arith.constant 0 : index
    %82 = vector.load %arg3[%c6, %c0_51, %c0_52] : memref<7x256x128xbf16, #tpu.memory_space<vmem>>, vector<1x256x128xbf16>
    %83 = vector.shape_cast %82 : vector<1x256x128xbf16> to vector<256x128xbf16>
    %cst_53 = arith.constant dense<0.000000e+00> : vector<128x128xf32>
    %84 = tpu.matmul %81, %83, %cst_53 {dimension_numbers = #tpu.dot_dimension_numbers<[1], [0], [0], [1], [0, 0, 1, 1], [], []>} : vector<128x256xbf16>, vector<256x128xbf16>, vector<128x128xf32> -> vector<128x128xf32>
    %c6_54 = arith.constant 6 : index
    %c0_55 = arith.constant 0 : index
    %c0_56 = arith.constant 0 : index
    %85 = vector.load %arg4[%c6_54, %c0_55, %c0_56] : memref<7x1x128xf32, #tpu.memory_space<vmem>>, vector<1x1x128xf32>
    %86 = vector.shape_cast %85 : vector<1x1x128xf32> to vector<1x128xf32>
    %87 = vector.broadcast %86 : vector<1x128xf32> to vector<128x128xf32>
    %88 = arith.addf %84, %87 : vector<128x128xf32>
    %89 = tpu.iota {dimensions = array<i32: 1>} : vector<128x128xi32>
    %c32_i32 = arith.constant 32 : i32
    %90 = vector.broadcast %c32_i32 : i32 to vector<128x128xi32>
    %91 = arith.cmpi sge, %89, %90 : vector<128x128xi32>
    %c35_i32 = arith.constant 35 : i32
    %92 = vector.broadcast %c35_i32 : i32 to vector<128x128xi32>
    %93 = arith.cmpi slt, %89, %92 : vector<128x128xi32>
    %94 = arith.andi %91, %93 : vector<128x128xi1>
    %95 = arith.addf %51, %88 : vector<128x128xf32>
    %cst_57 = arith.constant 0.000000e+00 : f32
    %96 = vector.broadcast %cst_57 : f32 to vector<128x128xf32>
    %97 = arith.select %94, %0, %96 : vector<128x128xi1>, vector<128x128xf32>
    %98 = arith.addf %95, %97 : vector<128x128xf32>
    %c0_58 = arith.constant 0 : index
    %c0_59 = arith.constant 0 : index
    %99 = vector.load %arg5[%c0_58, %c0_59] : memref<128x128xf32, #tpu.memory_space<vmem>>, vector<128x128xf32>
    tpu.vector_store %arg5[%c0_58, %c0_59], %98 {strides = array<i32>} : memref<128x128xf32, #tpu.memory_space<vmem>>, vector<128x128xf32>,
    return
  }
  func.func @transform_0(%arg0: i32) -> (i32, i32) {
    %c0_i32 = arith.constant 0 : i32
    %c0_i32_0 = arith.constant 0 : i32
    %c0_i32_1 = arith.constant 0 : i32
    return %c0_i32, %c0_i32_0 : i32, i32
  }
  func.func @transform_1(%arg0: i32) -> (i32, i32) {
    %c0_i32 = arith.constant 0 : i32
    %c0_i32_0 = arith.constant 0 : i32
    %c0_i32_1 = arith.constant 0 : i32
    return %c0_i32, %c0_i32_0 : i32, i32
  }
  func.func @transform_2(%arg0: i32) -> (i32, i32, i32) {
    %c0_i32 = arith.constant 0 : i32
    %c0_i32_0 = arith.constant 0 : i32
    %c0_i32_1 = arith.constant 0 : i32
    %c0_i32_2 = arith.constant 0 : i32
    return %c0_i32, %c0_i32_0, %c0_i32_1 : i32, i32, i32
  }
  func.func @transform_3(%arg0: i32) -> (i32, i32, i32) {
    %c0_i32 = arith.constant 0 : i32
    %c0_i32_0 = arith.constant 0 : i32
    %c0_i32_1 = arith.constant 0 : i32
    %c0_i32_2 = arith.constant 0 : i32
    return %c0_i32, %c0_i32_0, %c0_i32_1 : i32, i32, i32
  }
  func.func @transform_4(%arg0: i32) -> (i32, i32) {
    %c0_i32 = arith.constant 0 : i32
    %c0_i32_0 = arith.constant 0 : i32
    %c0_i32_1 = arith.constant 0 : i32
    return %c0_i32, %c0_i32_0 : i32, i32
  }
}

</mosaic_0001>

<llo_original>
// kernel: mat_deform_forward.1
$region0: #{mat_deform_forward.1}
  #allocation0 [shape = 'u32[]', space=smem, size = 0x4, offset = 0x4, fixed_abs, tag = 'smem constant byte address 0x4 - core index']
  #allocation1 [shape = 'u32[144,128]{1,0:T(1,128)}', space=vmem, size = 0x12000, scoped, tag = 'internal scratch']
  %s0 = inlined_call_operand.vmem [shape: f32[128,128], index: 0, kind: input, shape index: {}]
  %s1 = inlined_call_operand.vmem [shape: bf16[128,128], index: 1, kind: input, shape index: {}]
  %s2 = inlined_call_operand.vmem [shape: bf16[7,256,128], index: 2, kind: input, shape index: {}]
  %s3 = inlined_call_operand.vmem [shape: f32[7,1,128], index: 3, kind: input, shape index: {}]
  %s4 = inlined_call_operand.vmem [shape: f32[128,128], index: 4, kind: output, shape index: {}]
  %s5 = sld [smem:[#allocation0]]
  $region26: #{mat_deform_forward.1} parent=0
    _
  %s7 = ssub.s32 1, %s5
  %s8 = scalar_select 0, %s7, %s5
  // Predicated region
  $region2: #{mat_deform_forward.1} parent=0 // pred_check
    _
  $region3: #{mat_deform_forward.1} parent=0 // pred_check_branch
    %10 = sbr.rel (0) target = $region5
  $region4: #{mat_deform_forward.1} parent=0 // pred_region
    _
  $region5: #{mat_deform_forward.1} parent=0 // pred_fallthru
    _
  // Predicated region
  $region6: #{mat_deform_forward.1} parent=0 // pred_check
    _
  $region7: #{mat_deform_forward.1} parent=0 // pred_check_branch
    %12 = sbr.rel (0) target = $region9
  $region8: #{mat_deform_forward.1} parent=0 // pred_region
    _
  $region9: #{mat_deform_forward.1} parent=0 // pred_fallthru
    _
  // Predicated region
  $region10: #{mat_deform_forward.1} parent=0 // pred_check
    _
  $region11: #{mat_deform_forward.1} parent=0 // pred_check_branch
    %14 = sbr.rel (0) target = $region13
  $region12: #{mat_deform_forward.1} parent=0 // pred_region
    _
  $region13: #{mat_deform_forward.1} parent=0 // pred_fallthru
    _
  // Predicated region
  $region14: #{mat_deform_forward.1} parent=0 // pred_check
    _
  $region15: #{mat_deform_forward.1} parent=0 // pred_check_branch
    %16 = sbr.rel (0) target = $region17
  $region16: #{mat_deform_forward.1} parent=0 // pred_region
    _
  $region17: #{mat_deform_forward.1} parent=0 // pred_fallthru
    _
  %v18 = vld [vmem:[%s0] sm:$0xff]
  %v19 = vld [vmem:[%s0 + $0x8] sm:$0xff]
  %v20 = vld [vmem:[%s0 + $0x10] sm:$0xff]
  %v21 = vld [vmem:[%s0 + $0x18] sm:$0xff]
  %v22 = vld [vmem:[%s0 + $0x20] sm:$0xff]
  %v23 = vld [vmem:[%s0 + $0x28] sm:$0xff]
  %v24 = vld [vmem:[%s0 + $0x30] sm:$0xff]
  %v25 = vld [vmem:[%s0 + $0x38] sm:$0xff]
  %v26 = vld [vmem:[%s0 + $0x40] sm:$0xff]
  %v27 = vld [vmem:[%s0 + $0x48] sm:$0xff]
  %v28 = vld [vmem:[%s0 + $0x50] sm:$0xff]
  %v29 = vld [vmem:[%s0 + $0x58] sm:$0xff]
  %v30 = vld [vmem:[%s0 + $0x60] sm:$0xff]
  %v31 = vld [vmem:[%s0 + $0x68] sm:$0xff]
  %v32 = vld [vmem:[%s0 + $0x70] sm:$0xff]
  %v33 = vld [vmem:[%s0 + $0x78] sm:$0xff]
  %v34 = vld [vmem:[%s1] sm:$0xf]
  %v35 = vld [vmem:[%s1 + $0x4] sm:$0xf]
  %v36 = vld [vmem:[%s1 + $0x8] sm:$0xf]
  %v37 = vld [vmem:[%s1 + $0xc] sm:$0xf]
  %v38 = vld [vmem:[%s1 + $0x10] sm:$0xf]
  %v39 = vld [vmem:[%s1 + $0x14] sm:$0xf]
  %v40 = vld [vmem:[%s1 + $0x18] sm:$0xf]
  %v41 = vld [vmem:[%s1 + $0x1c] sm:$0xf]
  %v42 = vld [vmem:[%s1 + $0x20] sm:$0xf]
  %v43 = vld [vmem:[%s1 + $0x24] sm:$0xf]
  %v44 = vld [vmem:[%s1 + $0x28] sm:$0xf]
  %v45 = vld [vmem:[%s1 + $0x2c] sm:$0xf]
  %v46 = vld [vmem:[%s1 + $0x30] sm:$0xf]
  %v47 = vld [vmem:[%s1 + $0x34] sm:$0xf]
  %v48 = vld [vmem:[%s1 + $0x38] sm:$0xf]
  %v49 = vld [vmem:[%s1 + $0x3c] sm:$0xf]
  %v50 = vpack.c.bf16 %v19, %v18
  %v51 = vpack.c.bf16 %v21, %v20
  %v52 = vpack.c.bf16 %v23, %v22
  %v53 = vpack.c.bf16 %v25, %v24
  %v54 = vpack.c.bf16 %v27, %v26
  %v55 = vpack.c.bf16 %v29, %v28
  %v56 = vpack.c.bf16 %v31, %v30
  %v57 = vpack.c.bf16 %v33, %v32
  %v74 = vunpack.c.l.b16 %v34
  %v75 = vunpack.c.l.b16 %v35
  %v76 = vunpack.c.l.b16 %v36
  %v77 = vunpack.c.l.b16 %v37
  %v78 = vunpack.c.l.b16 %v38
  %v79 = vunpack.c.l.b16 %v39
  %v80 = vunpack.c.l.b16 %v40
  %v81 = vunpack.c.l.b16 %v41
  %v82 = vunpack.c.l.b16 %v42
  %v83 = vunpack.c.l.b16 %v43
  %v84 = vunpack.c.l.b16 %v44
  %v85 = vunpack.c.l.b16 %v45
  %v86 = vunpack.c.l.b16 %v46
  %v87 = vunpack.c.l.b16 %v47
  %v88 = vunpack.c.l.b16 %v48
  %v89 = vunpack.c.l.b16 %v49
  %v90 = vpack.c.b16 %v75, %v74
  %v91 = vpack.c.b16 %v77, %v76
  %v92 = vpack.c.b16 %v79, %v78
  %v93 = vpack.c.b16 %v81, %v80
  %v94 = vpack.c.b16 %v83, %v82
  %v95 = vpack.c.b16 %v85, %v84
  %v96 = vpack.c.b16 %v87, %v86
  %v97 = vpack.c.b16 %v89, %v88
  %106 = vmatprep.subr.bf16.mxu0 0
  %107 = vmatpush1.bf16.msra.mxu0 %v57
  %108 = vmatprep.subr.bf16.mxu0 0
  %109 = vmatpush1.bf16.msra.mxu0 %v56
  %110 = vmatprep.subr.bf16.mxu0 0
  %111 = vmatpush1.bf16.msra.mxu0 %v55
  %112 = vmatprep.subr.bf16.mxu0 0
  %113 = vmatpush1.bf16.msra.mxu0 %v54
  %114 = vmatprep.subr.bf16.mxu0 0
  %115 = vmatpush1.bf16.msra.mxu0 %v53
  %116 = vmatprep.subr.bf16.mxu0 0
  %117 = vmatpush1.bf16.msra.mxu0 %v52
  %118 = vmatprep.subr.bf16.mxu0 0
  %119 = vmatpush1.bf16.msra.mxu0 %v51
  %120 = vmatprep.subr.bf16.mxu0 0
  %121 = vmatpush1.bf16.msra.mxu0 %v50
  %122 = vmatprep.subr.bf16.mxu0 0
  %123 = vmatpush2.bf16.msra.mxu0 0
  %124 = vmatprep.subr.bf16.mxu0 0
  %125 = vmatpush2.bf16.msra.mxu0 0
  %126 = vmatprep.subr.bf16.mxu0 0
  %127 = vmatpush2.bf16.msra.mxu0 0
  %128 = vmatprep.subr.bf16.mxu0 0
  %129 = vmatpush2.bf16.msra.mxu0 0
  %130 = vmatprep.subr.bf16.mxu0 0
  %131 = vmatpush2.bf16.msra.mxu0 0
  %132 = vmatprep.subr.bf16.mxu0 0
  %133 = vmatpush2.bf16.msra.mxu0 0
  %134 = vmatprep.subr.bf16.mxu0 0
  %135 = vmatpush2.bf16.msra.mxu0 0
  %136 = vmatprep.subr.bf16.mxu0 0
  %137 = vmatpush2.bf16.msra.mxu0 0
  %138 = vmatprep.mubr.bf16.mxu0 0
  %139 = vmatmul.mubr.bf16.gmra.mxu0 %v90
  %v140 = vpop.f32.mrf.mxu0
  %v141 = vadd.f32 0.0, %v140
  %v142 = vpop.f32.mrf.mxu0
  %v143 = vpop.f32.mrf.mxu0
  %v144 = vadd.f32 0.0, %v143
  %v145 = vpop.f32.mrf.mxu0
  %146 = vmatprep.mubr.bf16.mxu0 0
  %147 = vmatmul.mubr.bf16.gmra.mxu0 %v91
  %v148 = vpop.f32.mrf.mxu0
  %v149 = vadd.f32 0.0, %v148
  %v150 = vpop.f32.mrf.mxu0
  %v151 = vpop.f32.mrf.mxu0
  %v152 = vadd.f32 0.0, %v151
  %v153 = vpop.f32.mrf.mxu0
  %154 = vmatprep.mubr.bf16.mxu0 0
  %155 = vmatmul.mubr.bf16.gmra.mxu0 %v92
  %v156 = vpop.f32.mrf.mxu0
  %v157 = vadd.f32 0.0, %v156
  %v158 = vpop.f32.mrf.mxu0
  %v159 = vpop.f32.mrf.mxu0
  %v160 = vadd.f32 0.0, %v159
  %v161 = vpop.f32.mrf.mxu0
  %162 = vmatprep.mubr.bf16.mxu0 0
  %163 = vmatmul.mubr.bf16.gmra.mxu0 %v93
  %v164 = vpop.f32.mrf.mxu0
  %v165 = vadd.f32 0.0, %v164
  %v166 = vpop.f32.mrf.mxu0
  %v167 = vpop.f32.mrf.mxu0
  %v168 = vadd.f32 0.0, %v167
  %v169 = vpop.f32.mrf.mxu0
  %170 = vmatprep.mubr.bf16.mxu0 0
  %171 = vmatmul.mubr.bf16.gmra.mxu0 %v94
  %v172 = vpop.f32.mrf.mxu0
  %v173 = vadd.f32 0.0, %v172
  %v174 = vpop.f32.mrf.mxu0
  %v175 = vpop.f32.mrf.mxu0
  %v176 = vadd.f32 0.0, %v175
  %v177 = vpop.f32.mrf.mxu0
  %178 = vmatprep.mubr.bf16.mxu0 0
  %179 = vmatmul.mubr.bf16.gmra.mxu0 %v95
  %v180 = vpop.f32.mrf.mxu0
  %v181 = vadd.f32 0.0, %v180
  %v182 = vpop.f32.mrf.mxu0
  %v183 = vpop.f32.mrf.mxu0
  %v184 = vadd.f32 0.0, %v183
  %v185 = vpop.f32.mrf.mxu0
  %186 = vmatprep.mubr.bf16.mxu0 0
  %187 = vmatmul.mubr.bf16.gmra.mxu0 %v96
  %v188 = vpop.f32.mrf.mxu0
  %v189 = vadd.f32 0.0, %v188
  %v190 = vpop.f32.mrf.mxu0
  %v191 = vpop.f32.mrf.mxu0
  %v192 = vadd.f32 0.0, %v191
  %v193 = vpop.f32.mrf.mxu0
  %194 = vmatprep.mubr.bf16.mxu0 0
  %195 = vmatmul.mubr.bf16.gmra.mxu0 %v97
  %v196 = vpop.f32.mrf.mxu0
  %v197 = vadd.f32 0.0, %v196
  %v198 = vpop.f32.mrf.mxu0
  %v199 = vpop.f32.mrf.mxu0
  %v200 = vadd.f32 0.0, %v199
  %v201 = vpop.f32.mrf.mxu0
  %202 = vdwg.mxu0
  %v203 = vpack.c.bf16 %v144, %v141
  %v204 = vpack.c.bf16 %v152, %v149
  %v205 = vpack.c.bf16 %v160, %v157
  %v206 = vpack.c.bf16 %v168, %v165
  %v207 = vpack.c.bf16 %v176, %v173
  %v208 = vpack.c.bf16 %v184, %v181
  %v209 = vpack.c.bf16 %v192, %v189
  %v210 = vpack.c.bf16 %v200, %v197
  %v211 = vld [vmem:[%s2] sm:$0xf]
  %v212 = vld [vmem:[%s2 + $0x4] sm:$0xf]
  %v213 = vld [vmem:[%s2 + $0x8] sm:$0xf]
  %v214 = vld [vmem:[%s2 + $0xc] sm:$0xf]
  %v215 = vld [vmem:[%s2 + $0x10] sm:$0xf]
  %v216 = vld [vmem:[%s2 + $0x14] sm:$0xf]
  %v217 = vld [vmem:[%s2 + $0x18] sm:$0xf]
  %v218 = vld [vmem:[%s2 + $0x1c] sm:$0xf]
  %v219 = vld [vmem:[%s2 + $0x20] sm:$0xf]
  %v220 = vld [vmem:[%s2 + $0x24] sm:$0xf]
  %v221 = vld [vmem:[%s2 + $0x28] sm:$0xf]
  %v222 = vld [vmem:[%s2 + $0x2c] sm:$0xf]
  %v223 = vld [vmem:[%s2 + $0x30] sm:$0xf]
  %v224 = vld [vmem:[%s2 + $0x34] sm:$0xf]
  %v225 = vld [vmem:[%s2 + $0x38] sm:$0xf]
  %v226 = vld [vmem:[%s2 + $0x3c] sm:$0xf]
  %v227 = vld [vmem:[%s2 + $0x40] sm:$0xf]
  %v228 = vld [vmem:[%s2 + $0x44] sm:$0xf]
  %v229 = vld [vmem:[%s2 + $0x48] sm:$0xf]
  %v230 = vld [vmem:[%s2 + $0x4c] sm:$0xf]
  %v231 = vld [vmem:[%s2 + $0x50] sm:$0xf]
  %v232 = vld [vmem:[%s2 + $0x54] sm:$0xf]
  %v233 = vld [vmem:[%s2 + $0x58] sm:$0xf]
  %v234 = vld [vmem:[%s2 + $0x5c] sm:$0xf]
  %v235 = vld [vmem:[%s2 + $0x60] sm:$0xf]
  %v236 = vld [vmem:[%s2 + $0x64] sm:$0xf]
  %v237 = vld [vmem:[%s2 + $0x68] sm:$0xf]
  %v238 = vld [vmem:[%s2 + $0x6c] sm:$0xf]
  %v239 = vld [vmem:[%s2 + $0x70] sm:$0xf]
  %v240 = vld [vmem:[%s2 + $0x74] sm:$0xf]
  %v241 = vld [vmem:[%s2 + $0x78] sm:$0xf]
  %v242 = vld [vmem:[%s2 + $0x7c] sm:$0xf]
  %v243 = vld [vmem:[%s3] sm:$0x1]
  %v245 = vlaneseq
  %v246 = vshrl.u32 %v245, 7
  %v247 = vsub.s32 0, %v246
  %v248 = vrot.slane %v243, %v247
  %v282 = vunpack.c.l.b16 %v211
  %v283 = vunpack.c.l.b16 %v212
  %v284 = vunpack.c.l.b16 %v213
  %v285 = vunpack.c.l.b16 %v214
  %v286 = vunpack.c.l.b16 %v215
  %v287 = vunpack.c.l.b16 %v216
  %v288 = vunpack.c.l.b16 %v217
  %v289 = vunpack.c.l.b16 %v218
  %v290 = vunpack.c.l.b16 %v219
  %v291 = vunpack.c.l.b16 %v220
  %v292 = vunpack.c.l.b16 %v221
  %v293 = vunpack.c.l.b16 %v222
  %v294 = vunpack.c.l.b16 %v223
  %v295 = vunpack.c.l.b16 %v224
  %v296 = vunpack.c.l.b16 %v225
  %v297 = vunpack.c.l.b16 %v226
  %v298 = vunpack.c.l.b16 %v227
  %v299 = vunpack.c.l.b16 %v228
  %v300 = vunpack.c.l.b16 %v229
  %v301 = vunpack.c.l.b16 %v230
  %v302 = vunpack.c.l.b16 %v231
  %v303 = vunpack.c.l.b16 %v232
  %v304 = vunpack.c.l.b16 %v233
  %v305 = vunpack.c.l.b16 %v234
  %v306 = vunpack.c.l.b16 %v235
  %v307 = vunpack.c.l.b16 %v236
  %v308 = vunpack.c.l.b16 %v237
  %v309 = vunpack.c.l.b16 %v238
  %v310 = vunpack.c.l.b16 %v239
  %v311 = vunpack.c.l.b16 %v240
  %v312 = vunpack.c.l.b16 %v241
  %v313 = vunpack.c.l.b16 %v242
  %v314 = vpack.c.b16 %v283, %v282
  %v315 = vpack.c.b16 %v285, %v284
  %v316 = vpack.c.b16 %v287, %v286
  %v317 = vpack.c.b16 %v289, %v288
  %v318 = vpack.c.b16 %v291, %v290
  %v319 = vpack.c.b16 %v293, %v292
  %v320 = vpack.c.b16 %v295, %v294
  %v321 = vpack.c.b16 %v297, %v296
  %v322 = vpack.c.b16 %v299, %v298
  %v323 = vpack.c.b16 %v301, %v300
  %v324 = vpack.c.b16 %v303, %v302
  %v325 = vpack.c.b16 %v305, %v304
  %v326 = vpack.c.b16 %v307, %v306
  %v327 = vpack.c.b16 %v309, %v308
  %v328 = vpack.c.b16 %v311, %v310
  %v329 = vpack.c.b16 %v313, %v312
  %346 = vmatprep.subr.bf16.mxu0 0
  %347 = vmatpush1.bf16.msra.mxu0 %v321
  %348 = vmatprep.subr.bf16.mxu0 0
  %349 = vmatpush1.bf16.msra.mxu0 %v320
  %350 = vmatprep.subr.bf16.mxu0 0
  %351 = vmatpush1.bf16.msra.mxu0 %v319
  %352 = vmatprep.subr.bf16.mxu0 0
  %353 = vmatpush1.bf16.msra.mxu0 %v318
  %354 = vmatprep.subr.bf16.mxu0 0
  %355 = vmatpush1.bf16.msra.mxu0 %v317
  %356 = vmatprep.subr.bf16.mxu0 0
  %357 = vmatpush1.bf16.msra.mxu0 %v316
  %358 = vmatprep.subr.bf16.mxu0 0
  %359 = vmatpush1.bf16.msra.mxu0 %v315
  %360 = vmatprep.subr.bf16.mxu0 0
  %361 = vmatpush1.bf16.msra.mxu0 %v314
  %362 = vmatprep.subr.bf16.mxu0 0
  %363 = vmatpush2.bf16.msra.mxu0 %v329
  %364 = vmatprep.subr.bf16.mxu0 0
  %365 = vmatpush2.bf16.msra.mxu0 %v328
  %366 = vmatprep.subr.bf16.mxu0 0
  %367 = vmatpush2.bf16.msra.mxu0 %v327
  %368 = vmatprep.subr.bf16.mxu0 0
  %369 = vmatpush2.bf16.msra.mxu0 %v326
  %370 = vmatprep.subr.bf16.mxu0 0
  %371 = vmatpush2.bf16.msra.mxu0 %v325
  %372 = vmatprep.subr.bf16.mxu0 0
  %373 = vmatpush2.bf16.msra.mxu0 %v324
  %374 = vmatprep.subr.bf16.mxu0 0
  %375 = vmatpush2.bf16.msra.mxu0 %v323
  %376 = vmatprep.subr.bf16.mxu0 0
  %377 = vmatpush2.bf16.msra.mxu0 %v322
  %378 = vmatprep.mubr.bf16.mxu0 %v203
  %379 = vmatmul.mubr.bf16.gmra.mxu0 %v50
  %v380 = vpop.f32.mrf.mxu0
  %v381 = vadd.f32 %v248, %v380
  %v382 = vpop.f32.mrf.mxu0
  %v383 = vpop.f32.mrf.mxu0
  %v384 = vadd.f32 %v248, %v383
  %v385 = vpop.f32.mrf.mxu0
  %386 = vmatprep.mubr.bf16.mxu0 %v204
  %387 = vmatmul.mubr.bf16.gmra.mxu0 %v51
  %v388 = vpop.f32.mrf.mxu0
  %v389 = vadd.f32 %v248, %v388
  %v390 = vpop.f32.mrf.mxu0
  %v391 = vpop.f32.mrf.mxu0
  %v392 = vadd.f32 %v248, %v391
  %v393 = vpop.f32.mrf.mxu0
  %394 = vmatprep.mubr.bf16.mxu0 %v205
  %395 = vmatmul.mubr.bf16.gmra.mxu0 %v52
  %v396 = vpop.f32.mrf.mxu0
  %v397 = vadd.f32 %v248, %v396
  %v398 = vpop.f32.mrf.mxu0
  %v399 = vpop.f32.mrf.mxu0
  %v400 = vadd.f32 %v248, %v399
  %v401 = vpop.f32.mrf.mxu0
  %402 = vmatprep.mubr.bf16.mxu0 %v206
  %403 = vmatmul.mubr.bf16.gmra.mxu0 %v53
  %v404 = vpop.f32.mrf.mxu0
  %v405 = vadd.f32 %v248, %v404
  %v406 = vpop.f32.mrf.mxu0
  %v407 = vpop.f32.mrf.mxu0
  %v408 = vadd.f32 %v248, %v407
  %v409 = vpop.f32.mrf.mxu0
  %410 = vmatprep.mubr.bf16.mxu0 %v207
  %411 = vmatmul.mubr.bf16.gmra.mxu0 %v54
  %v412 = vpop.f32.mrf.mxu0
  %v413 = vadd.f32 %v248, %v412
  %v414 = vpop.f32.mrf.mxu0
  %v415 = vpop.f32.mrf.mxu0
  %v416 = vadd.f32 %v248, %v415
  %v417 = vpop.f32.mrf.mxu0
  %418 = vmatprep.mubr.bf16.mxu0 %v208
  %419 = vmatmul.mubr.bf16.gmra.mxu0 %v55
  %v420 = vpop.f32.mrf.mxu0
  %v421 = vadd.f32 %v248, %v420
  %v422 = vpop.f32.mrf.mxu0
  %v423 = vpop.f32.mrf.mxu0
  %v424 = vadd.f32 %v248, %v423
  %v425 = vpop.f32.mrf.mxu0
  %426 = vmatprep.mubr.bf16.mxu0 %v209
  %427 = vmatmul.mubr.bf16.gmra.mxu0 %v56
  %v428 = vpop.f32.mrf.mxu0
  %v429 = vadd.f32 %v248, %v428
  %v430 = vpop.f32.mrf.mxu0
  %v431 = vpop.f32.mrf.mxu0
  %v432 = vadd.f32 %v248, %v431
  %v433 = vpop.f32.mrf.mxu0
  %434 = vmatprep.mubr.bf16.mxu0 %v210
  %435 = vmatmul.mubr.bf16.gmra.mxu0 %v57
  %v436 = vpop.f32.mrf.mxu0
  %v437 = vadd.f32 %v248, %v436
  %v438 = vpop.f32.mrf.mxu0
  %v439 = vpop.f32.mrf.mxu0
  %v440 = vadd.f32 %v248, %v439
  %v441 = vpop.f32.mrf.mxu0
  %442 = vdwg.mxu0
  %v443 = vmax.f32 %v381, 0.0
  %v444 = vmax.f32 %v384, 0.0
  %v445 = vmax.f32 %v389, 0.0
  %v446 = vmax.f32 %v392, 0.0
  %v447 = vmax.f32 %v397, 0.0
  %v448 = vmax.f32 %v400, 0.0
  %v449 = vmax.f32 %v405, 0.0
  %v450 = vmax.f32 %v408, 0.0
  %v451 = vmax.f32 %v413, 0.0
  %v452 = vmax.f32 %v416, 0.0
  %v453 = vmax.f32 %v421, 0.0
  %v454 = vmax.f32 %v424, 0.0
  %v455 = vmax.f32 %v429, 0.0
  %v456 = vmax.f32 %v432, 0.0
  %v457 = vmax.f32 %v437, 0.0
  %v458 = vmax.f32 %v440, 0.0
  %v459 = vpack.c.bf16 %v444, %v443
  %v460 = vpack.c.bf16 %v446, %v445
  %v461 = vpack.c.bf16 %v448, %v447
  %v462 = vpack.c.bf16 %v450, %v449
  %v463 = vpack.c.bf16 %v452, %v451
  %v464 = vpack.c.bf16 %v454, %v453
  %v465 = vpack.c.bf16 %v456, %v455
  %v466 = vpack.c.bf16 %v458, %v457
  %467 = vmatprep.subr.bf16.mxu0 0
  %468 = vmatpush1.bf16.msra.mxu0 %v466
  %469 = vmatprep.subr.bf16.mxu0 0
  %470 = vmatpush1.bf16.msra.mxu0 %v465
  %471 = vmatprep.subr.bf16.mxu0 0
  %472 = vmatpush1.bf16.msra.mxu0 %v464
  %473 = vmatprep.subr.bf16.mxu0 0
  %474 = vmatpush1.bf16.msra.mxu0 %v463
  %475 = vmatprep.subr.bf16.mxu0 0
  %476 = vmatpush1.bf16.msra.mxu0 %v462
  %477 = vmatprep.subr.bf16.mxu0 0
  %478 = vmatpush1.bf16.msra.mxu0 %v461
  %479 = vmatprep.subr.bf16.mxu0 0
  %480 = vmatpush1.bf16.msra.mxu0 %v460
  %481 = vmatprep.subr.bf16.mxu0 0
  %482 = vmatpush1.bf16.msra.mxu0 %v459
  %483 = vmatprep.subr.bf16.mxu0 0
  %484 = vmatpush2.bf16.msra.mxu0 0
  %485 = vmatprep.subr.bf16.mxu0 0
  %486 = vmatpush2.bf16.msra.mxu0 0
  %487 = vmatprep.subr.bf16.mxu0 0
  %488 = vmatpush2.bf16.msra.mxu0 0
  %489 = vmatprep.subr.bf16.mxu0 0
  %490 = vmatpush2.bf16.msra.mxu0 0
  %491 = vmatprep.subr.bf16.mxu0 0
  %492 = vmatpush2.bf16.msra.mxu0 0
  %493 = vmatprep.subr.bf16.mxu0 0
  %494 = vmatpush2.bf16.msra.mxu0 0
  %495 = vmatprep.subr.bf16.mxu0 0
  %496 = vmatpush2.bf16.msra.mxu0 0
  %497 = vmatprep.subr.bf16.mxu0 0
  %498 = vmatpush2.bf16.msra.mxu0 0
  %499 = vmatprep.mubr.bf16.mxu0 0
  %500 = vmatmul.mubr.bf16.gmra.mxu0 %v90
  %v501 = vpop.f32.mrf.mxu0
  %v502 = vadd.f32 0.0, %v501
  %v503 = vpop.f32.mrf.mxu0
  %v504 = vpop.f32.mrf.mxu0
  %v505 = vadd.f32 0.0, %v504
  %v506 = vpop.f32.mrf.mxu0
  %507 = vmatprep.mubr.bf16.mxu0 0
  %508 = vmatmul.mubr.bf16.gmra.mxu0 %v91
  %v509 = vpop.f32.mrf.mxu0
  %v510 = vadd.f32 0.0, %v509
  %v511 = vpop.f32.mrf.mxu0
  %v512 = vpop.f32.mrf.mxu0
  %v513 = vadd.f32 0.0, %v512
  %v514 = vpop.f32.mrf.mxu0
  %515 = vmatprep.mubr.bf16.mxu0 0
  %516 = vmatmul.mubr.bf16.gmra.mxu0 %v92
  %v517 = vpop.f32.mrf.mxu0
  %v518 = vadd.f32 0.0, %v517
  %v519 = vpop.f32.mrf.mxu0
  %v520 = vpop.f32.mrf.mxu0
  %v521 = vadd.f32 0.0, %v520
  %v522 = vpop.f32.mrf.mxu0
  %523 = vmatprep.mubr.bf16.mxu0 0
  %524 = vmatmul.mubr.bf16.gmra.mxu0 %v93
  %v525 = vpop.f32.mrf.mxu0
  %v526 = vadd.f32 0.0, %v525
  %v527 = vpop.f32.mrf.mxu0
  %v528 = vpop.f32.mrf.mxu0
  %v529 = vadd.f32 0.0, %v528
  %v530 = vpop.f32.mrf.mxu0
  %531 = vmatprep.mubr.bf16.mxu0 0
  %532 = vmatmul.mubr.bf16.gmra.mxu0 %v94
  %v533 = vpop.f32.mrf.mxu0
  %v534 = vadd.f32 0.0, %v533
  %v535 = vpop.f32.mrf.mxu0
  %v536 = vpop.f32.mrf.mxu0
  %v537 = vadd.f32 0.0, %v536
  %v538 = vpop.f32.mrf.mxu0
  %539 = vmatprep.mubr.bf16.mxu0 0
  %540 = vmatmul.mubr.bf16.gmra.mxu0 %v95
  %v541 = vpop.f32.mrf.mxu0
  %v542 = vadd.f32 0.0, %v541
  %v543 = vpop.f32.mrf.mxu0
  %v544 = vpop.f32.mrf.mxu0
  %v545 = vadd.f32 0.0, %v544
  %v546 = vpop.f32.mrf.mxu0
  %547 = vmatprep.mubr.bf16.mxu0 0
  %548 = vmatmul.mubr.bf16.gmra.mxu0 %v96
  %v549 = vpop.f32.mrf.mxu0
  %v550 = vadd.f32 0.0, %v549
  %v551 = vpop.f32.mrf.mxu0
  %v552 = vpop.f32.mrf.mxu0
  %v553 = vadd.f32 0.0, %v552
  %v554 = vpop.f32.mrf.mxu0
  %555 = vmatprep.mubr.bf16.mxu0 0
  %556 = vmatmul.mubr.bf16.gmra.mxu0 %v97
  %v557 = vpop.f32.mrf.mxu0
  %v558 = vadd.f32 0.0, %v557
  %v559 = vpop.f32.mrf.mxu0
  %v560 = vpop.f32.mrf.mxu0
  %v561 = vadd.f32 0.0, %v560
  %v562 = vpop.f32.mrf.mxu0
  %563 = vdwg.mxu0
  %v564 = vpack.c.bf16 %v505, %v502
  %v565 = vpack.c.bf16 %v513, %v510
  %v566 = vpack.c.bf16 %v521, %v518
  %v567 = vpack.c.bf16 %v529, %v526
  %v568 = vpack.c.bf16 %v537, %v534
  %v569 = vpack.c.bf16 %v545, %v542
  %v570 = vpack.c.bf16 %v553, %v550
  %v571 = vpack.c.bf16 %v561, %v558
  %s572 = scalar_lea.vmem %s2, 128
  %v573 = vld [vmem:[%s572] sm:$0xf]
  %v574 = vld [vmem:[%s572 + $0x4] sm:$0xf]
  %v575 = vld [vmem:[%s572 + $0x8] sm:$0xf]
  %v576 = vld [vmem:[%s572 + $0xc] sm:$0xf]
  %v577 = vld [vmem:[%s572 + $0x10] sm:$0xf]
  %v578 = vld [vmem:[%s572 + $0x14] sm:$0xf]
  %v579 = vld [vmem:[%s572 + $0x18] sm:$0xf]
  %v580 = vld [vmem:[%s572 + $0x1c] sm:$0xf]
  %v581 = vld [vmem:[%s572 + $0x20] sm:$0xf]
  %v582 = vld [vmem:[%s572 + $0x24] sm:$0xf]
  %v583 = vld [vmem:[%s572 + $0x28] sm:$0xf]
  %v584 = vld [vmem:[%s572 + $0x2c] sm:$0xf]
  %v585 = vld [vmem:[%s572 + $0x30] sm:$0xf]
  %v586 = vld [vmem:[%s572 + $0x34] sm:$0xf]
  %v587 = vld [vmem:[%s572 + $0x38] sm:$0xf]
  %v588 = vld [vmem:[%s572 + $0x3c] sm:$0xf]
  %v589 = vld [vmem:[%s572 + $0x40] sm:$0xf]
  %v590 = vld [vmem:[%s572 + $0x44] sm:$0xf]
  %v591 = vld [vmem:[%s572 + $0x48] sm:$0xf]
  %v592 = vld [vmem:[%s572 + $0x4c] sm:$0xf]
  %v593 = vld [vmem:[%s572 + $0x50] sm:$0xf]
  %v594 = vld [vmem:[%s572 + $0x54] sm:$0xf]
  %v595 = vld [vmem:[%s572 + $0x58] sm:$0xf]
  %v596 = vld [vmem:[%s572 + $0x5c] sm:$0xf]
  %v597 = vld [vmem:[%s572 + $0x60] sm:$0xf]
  %v598 = vld [vmem:[%s572 + $0x64] sm:$0xf]
  %v599 = vld [vmem:[%s572 + $0x68] sm:$0xf]
  %v600 = vld [vmem:[%s572 + $0x6c] sm:$0xf]
  %v601 = vld [vmem:[%s572 + $0x70] sm:$0xf]
  %v602 = vld [vmem:[%s572 + $0x74] sm:$0xf]
  %v603 = vld [vmem:[%s572 + $0x78] sm:$0xf]
  %v604 = vld [vmem:[%s572 + $0x7c] sm:$0xf]
  %s605 = scalar_lea.vmem %s3, 1
  %v606 = vld [vmem:[%s605] sm:$0x1]
  %v608 = vlaneseq
  %v609 = vshrl.u32 %v608, 7
  %v610 = vsub.s32 0, %v609
  %v611 = vrot.slane %v606, %v610
  %v645 = vunpack.c.l.b16 %v573
  %v646 = vunpack.c.l.b16 %v574
  %v647 = vunpack.c.l.b16 %v575
  %v648 = vunpack.c.l.b16 %v576
  %v649 = vunpack.c.l.b16 %v577
  %v650 = vunpack.c.l.b16 %v578
  %v651 = vunpack.c.l.b16 %v579
  %v652 = vunpack.c.l.b16 %v580
  %v653 = vunpack.c.l.b16 %v581
  %v654 = vunpack.c.l.b16 %v582
  %v655 = vunpack.c.l.b16 %v583
  %v656 = vunpack.c.l.b16 %v584
  %v657 = vunpack.c.l.b16 %v585
  %v658 = vunpack.c.l.b16 %v586
  %v659 = vunpack.c.l.b16 %v587
  %v660 = vunpack.c.l.b16 %v588
  %v661 = vunpack.c.l.b16 %v589
  %v662 = vunpack.c.l.b16 %v590
  %v663 = vunpack.c.l.b16 %v591
  %v664 = vunpack.c.l.b16 %v592
  %v665 = vunpack.c.l.b16 %v593
  %v666 = vunpack.c.l.b16 %v594
  %v667 = vunpack.c.l.b16 %v595
  %v668 = vunpack.c.l.b16 %v596
  %v669 = vunpack.c.l.b16 %v597
  %v670 = vunpack.c.l.b16 %v598
  %v671 = vunpack.c.l.b16 %v599
  %v672 = vunpack.c.l.b16 %v600
  %v673 = vunpack.c.l.b16 %v601
  %v674 = vunpack.c.l.b16 %v602
  %v675 = vunpack.c.l.b16 %v603
  %v676 = vunpack.c.l.b16 %v604
  %v677 = vpack.c.b16 %v646, %v645
  %v678 = vpack.c.b16 %v648, %v647
  %v679 = vpack.c.b16 %v650, %v649
  %v680 = vpack.c.b16 %v652, %v651
  %v681 = vpack.c.b16 %v654, %v653
  %v682 = vpack.c.b16 %v656, %v655
  %v683 = vpack.c.b16 %v658, %v657
  %v684 = vpack.c.b16 %v660, %v659
  %v685 = vpack.c.b16 %v662, %v661
  %v686 = vpack.c.b16 %v664, %v663
  %v687 = vpack.c.b16 %v666, %v665
  %v688 = vpack.c.b16 %v668, %v667
  %v689 = vpack.c.b16 %v670, %v669
  %v690 = vpack.c.b16 %v672, %v671
  %v691 = vpack.c.b16 %v674, %v673
  %v692 = vpack.c.b16 %v676, %v675
  %709 = vmatprep.subr.bf16.mxu0 0
  %710 = vmatpush1.bf16.msra.mxu0 %v684
  %711 = vmatprep.subr.bf16.mxu0 0
  %712 = vmatpush1.bf16.msra.mxu0 %v683
  %713 = vmatprep.subr.bf16.mxu0 0
  %714 = vmatpush1.bf16.msra.mxu0 %v682
  %715 = vmatprep.subr.bf16.mxu0 0
  %716 = vmatpush1.bf16.msra.mxu0 %v681
  %717 = vmatprep.subr.bf16.mxu0 0
  %718 = vmatpush1.bf16.msra.mxu0 %v680
  %719 = vmatprep.subr.bf16.mxu0 0
  %720 = vmatpush1.bf16.msra.mxu0 %v679
  %721 = vmatprep.subr.bf16.mxu0 0
  %722 = vmatpush1.bf16.msra.mxu0 %v678
  %723 = vmatprep.subr.bf16.mxu0 0
  %724 = vmatpush1.bf16.msra.mxu0 %v677
  %725 = vmatprep.subr.bf16.mxu0 0
  %726 = vmatpush2.bf16.msra.mxu0 %v692
  %727 = vmatprep.subr.bf16.mxu0 0
  %728 = vmatpush2.bf16.msra.mxu0 %v691
  %729 = vmatprep.subr.bf16.mxu0 0
  %730 = vmatpush2.bf16.msra.mxu0 %v690
  %731 = vmatprep.subr.bf16.mxu0 0
  %732 = vmatpush2.bf16.msra.mxu0 %v689
  %733 = vmatprep.subr.bf16.mxu0 0
  %734 = vmatpush2.bf16.msra.mxu0 %v688
  %735 = vmatprep.subr.bf16.mxu0 0
  %736 = vmatpush2.bf16.msra.mxu0 %v687
  %737 = vmatprep.subr.bf16.mxu0 0
  %738 = vmatpush2.bf16.msra.mxu0 %v686
  %739 = vmatprep.subr.bf16.mxu0 0
  %740 = vmatpush2.bf16.msra.mxu0 %v685
  %741 = vmatprep.mubr.bf16.mxu0 %v564
  %742 = vmatmul.mubr.bf16.gmra.mxu0 %v459
  %v743 = vpop.f32.mrf.mxu0
  %v744 = vadd.f32 %v611, %v743
  %v745 = vpop.f32.mrf.mxu0
  %v746 = vpop.f32.mrf.mxu0
  %v747 = vadd.f32 %v611, %v746
  %v748 = vpop.f32.mrf.mxu0
  %749 = vmatprep.mubr.bf16.mxu0 %v565
  %750 = vmatmul.mubr.bf16.gmra.mxu0 %v460
  %v751 = vpop.f32.mrf.mxu0
  %v752 = vadd.f32 %v611, %v751
  %v753 = vpop.f32.mrf.mxu0
  %v754 = vpop.f32.mrf.mxu0
  %v755 = vadd.f32 %v611, %v754
  %v756 = vpop.f32.mrf.mxu0
  %757 = vmatprep.mubr.bf16.mxu0 %v566
  %758 = vmatmul.mubr.bf16.gmra.mxu0 %v461
  %v759 = vpop.f32.mrf.mxu0
  %v760 = vadd.f32 %v611, %v759
  %v761 = vpop.f32.mrf.mxu0
  %v762 = vpop.f32.mrf.mxu0
  %v763 = vadd.f32 %v611, %v762
  %v764 = vpop.f32.mrf.mxu0
  %765 = vmatprep.mubr.bf16.mxu0 %v567
  %766 = vmatmul.mubr.bf16.gmra.mxu0 %v462
  %v767 = vpop.f32.mrf.mxu0
  %v768 = vadd.f32 %v611, %v767
  %v769 = vpop.f32.mrf.mxu0
  %v770 = vpop.f32.mrf.mxu0
  %v771 = vadd.f32 %v611, %v770
  %v772 = vpop.f32.mrf.mxu0
  %773 = vmatprep.mubr.bf16.mxu0 %v568
  %774 = vmatmul.mubr.bf16.gmra.mxu0 %v463
  %v775 = vpop.f32.mrf.mxu0
  %v776 = vadd.f32 %v611, %v775
  %v777 = vpop.f32.mrf.mxu0
  %v778 = vpop.f32.mrf.mxu0
  %v779 = vadd.f32 %v611, %v778
  %v780 = vpop.f32.mrf.mxu0
  %781 = vmatprep.mubr.bf16.mxu0 %v569
  %782 = vmatmul.mubr.bf16.gmra.mxu0 %v464
  %v783 = vpop.f32.mrf.mxu0
  %v784 = vadd.f32 %v611, %v783
  %v785 = vpop.f32.mrf.mxu0
  %v786 = vpop.f32.mrf.mxu0
  %v787 = vadd.f32 %v611, %v786
  %v788 = vpop.f32.mrf.mxu0
  %789 = vmatprep.mubr.bf16.mxu0 %v570
  %790 = vmatmul.mubr.bf16.gmra.mxu0 %v465
  %v791 = vpop.f32.mrf.mxu0
  %v792 = vadd.f32 %v611, %v791
  %v793 = vpop.f32.mrf.mxu0
  %v794 = vpop.f32.mrf.mxu0
  %v795 = vadd.f32 %v611, %v794
  %v796 = vpop.f32.mrf.mxu0
  %797 = vmatprep.mubr.bf16.mxu0 %v571
  %798 = vmatmul.mubr.bf16.gmra.mxu0 %v466
  %v799 = vpop.f32.mrf.mxu0
  %v800 = vadd.f32 %v611, %v799
  %v801 = vpop.f32.mrf.mxu0
  %v802 = vpop.f32.mrf.mxu0
  %v803 = vadd.f32 %v611, %v802
  %v804 = vpop.f32.mrf.mxu0
  %805 = vdwg.mxu0
  %v806 = vmax.f32 %v744, 0.0
  %v807 = vmax.f32 %v747, 0.0
  %v808 = vmax.f32 %v752, 0.0
  %v809 = vmax.f32 %v755, 0.0
  %v810 = vmax.f32 %v760, 0.0
  %v811 = vmax.f32 %v763, 0.0
  %v812 = vmax.f32 %v768, 0.0
  %v813 = vmax.f32 %v771, 0.0
  %v814 = vmax.f32 %v776, 0.0
  %v815 = vmax.f32 %v779, 0.0
  %v816 = vmax.f32 %v784, 0.0
  %v817 = vmax.f32 %v787, 0.0
  %v818 = vmax.f32 %v792, 0.0
  %v819 = vmax.f32 %v795, 0.0
  %v820 = vmax.f32 %v800, 0.0
  %v821 = vmax.f32 %v803, 0.0
  %v822 = vpack.c.bf16 %v807, %v806
  %v823 = vpack.c.bf16 %v809, %v808
  %v824 = vpack.c.bf16 %v811, %v810
  %v825 = vpack.c.bf16 %v813, %v812
  %v826 = vpack.c.bf16 %v815, %v814
  %v827 = vpack.c.bf16 %v817, %v816
  %v828 = vpack.c.bf16 %v819, %v818
  %v829 = vpack.c.bf16 %v821, %v820
  %830 = vmatprep.subr.bf16.mxu0 0
  %831 = vmatpush1.bf16.msra.mxu0 %v829
  %832 = vmatprep.subr.bf16.mxu0 0
  %833 = vmatpush1.bf16.msra.mxu0 %v828
  %834 = vmatprep.subr.bf16.mxu0 0
  %835 = vmatpush1.bf16.msra.mxu0 %v827
  %836 = vmatprep.subr.bf16.mxu0 0
  %837 = vmatpush1.bf16.msra.mxu0 %v826
  %838 = vmatprep.subr.bf16.mxu0 0
  %839 = vmatpush1.bf16.msra.mxu0 %v825
  %840 = vmatprep.subr.bf16.mxu0 0
  %841 = vmatpush1.bf16.msra.mxu0 %v824
  %842 = vmatprep.subr.bf16.mxu0 0
  %843 = vmatpush1.bf16.msra.mxu0 %v823
  %844 = vmatprep.subr.bf16.mxu0 0
  %845 = vmatpush1.bf16.msra.mxu0 %v822
  %846 = vmatprep.subr.bf16.mxu0 0
  %847 = vmatpush2.bf16.msra.mxu0 0
  %848 = vmatprep.subr.bf16.mxu0 0
  %849 = vmatpush2.bf16.msra.mxu0 0
  %850 = vmatprep.subr.bf16.mxu0 0
  %851 = vmatpush2.bf16.msra.mxu0 0
  %852 = vmatprep.subr.bf16.mxu0 0
  %853 = vmatpush2.bf16.msra.mxu0 0
  %854 = vmatprep.subr.bf16.mxu0 0
  %855 = vmatpush2.bf16.msra.mxu0 0
  %856 = vmatprep.subr.bf16.mxu0 0
  %857 = vmatpush2.bf16.msra.mxu0 0
  %858 = vmatprep.subr.bf16.mxu0 0
  %859 = vmatpush2.bf16.msra.mxu0 0
  %860 = vmatprep.subr.bf16.mxu0 0
  %861 = vmatpush2.bf16.msra.mxu0 0
  %862 = vmatprep.mubr.bf16.mxu0 0
  %863 = vmatmul.mubr.bf16.gmra.mxu0 %v90
  %v864 = vpop.f32.mrf.mxu0
  %v865 = vadd.f32 0.0, %v864
  %v866 = vpop.f32.mrf.mxu0
  %v867 = vpop.f32.mrf.mxu0
  %v868 = vadd.f32 0.0, %v867
  %v869 = vpop.f32.mrf.mxu0
  %870 = vmatprep.mubr.bf16.mxu0 0
  %871 = vmatmul.mubr.bf16.gmra.mxu0 %v91
  %v872 = vpop.f32.mrf.mxu0
  %v873 = vadd.f32 0.0, %v872
  %v874 = vpop.f32.mrf.mxu0
  %v875 = vpop.f32.mrf.mxu0
  %v876 = vadd.f32 0.0, %v875
  %v877 = vpop.f32.mrf.mxu0
  %878 = vmatprep.mubr.bf16.mxu0 0
  %879 = vmatmul.mubr.bf16.gmra.mxu0 %v92
  %v880 = vpop.f32.mrf.mxu0
  %v881 = vadd.f32 0.0, %v880
  %v882 = vpop.f32.mrf.mxu0
  %v883 = vpop.f32.mrf.mxu0
  %v884 = vadd.f32 0.0, %v883
  %v885 = vpop.f32.mrf.mxu0
  %886 = vmatprep.mubr.bf16.mxu0 0
  %887 = vmatmul.mubr.bf16.gmra.mxu0 %v93
  %v888 = vpop.f32.mrf.mxu0
  %v889 = vadd.f32 0.0, %v888
  %v890 = vpop.f32.mrf.mxu0
  %v891 = vpop.f32.mrf.mxu0
  %v892 = vadd.f32 0.0, %v891
  %v893 = vpop.f32.mrf.mxu0
  %894 = vmatprep.mubr.bf16.mxu0 0
  %895 = vmatmul.mubr.bf16.gmra.mxu0 %v94
  %v896 = vpop.f32.mrf.mxu0
  %v897 = vadd.f32 0.0, %v896
  %v898 = vpop.f32.mrf.mxu0
  %v899 = vpop.f32.mrf.mxu0
  %v900 = vadd.f32 0.0, %v899
  %v901 = vpop.f32.mrf.mxu0
  %902 = vmatprep.mubr.bf16.mxu0 0
  %903 = vmatmul.mubr.bf16.gmra.mxu0 %v95
  %v904 = vpop.f32.mrf.mxu0
  %v905 = vadd.f32 0.0, %v904
  %v906 = vpop.f32.mrf.mxu0
  %v907 = vpop.f32.mrf.mxu0
  %v908 = vadd.f32 0.0, %v907
  %v909 = vpop.f32.mrf.mxu0
  %910 = vmatprep.mubr.bf16.mxu0 0
  %911 = vmatmul.mubr.bf16.gmra.mxu0 %v96
  %v912 = vpop.f32.mrf.mxu0
  %v913 = vadd.f32 0.0, %v912
  %v914 = vpop.f32.mrf.mxu0
  %v915 = vpop.f32.mrf.mxu0
  %v916 = vadd.f32 0.0, %v915
  %v917 = vpop.f32.mrf.mxu0
  %918 = vmatprep.mubr.bf16.mxu0 0
  %919 = vmatmul.mubr.bf16.gmra.mxu0 %v97
  %v920 = vpop.f32.mrf.mxu0
  %v921 = vadd.f32 0.0, %v920
  %v922 = vpop.f32.mrf.mxu0
  %v923 = vpop.f32.mrf.mxu0
  %v924 = vadd.f32 0.0, %v923
  %v925 = vpop.f32.mrf.mxu0
  %926 = vdwg.mxu0
  %v927 = vpack.c.bf16 %v868, %v865
  %v928 = vpack.c.bf16 %v876, %v873
  %v929 = vpack.c.bf16 %v884, %v881
  %v930 = vpack.c.bf16 %v892, %v889
  %v931 = vpack.c.bf16 %v900, %v897
  %v932 = vpack.c.bf16 %v908, %v905
  %v933 = vpack.c.bf16 %v916, %v913
  %v934 = vpack.c.bf16 %v924, %v921
  %s935 = scalar_lea.vmem %s2, 256
  %v936 = vld [vmem:[%s935] sm:$0xf]
  %v937 = vld [vmem:[%s935 + $0x4] sm:$0xf]
  %v938 = vld [vmem:[%s935 + $0x8] sm:$0xf]
  %v939 = vld [vmem:[%s935 + $0xc] sm:$0xf]
  %v940 = vld [vmem:[%s935 + $0x10] sm:$0xf]
  %v941 = vld [vmem:[%s935 + $0x14] sm:$0xf]
  %v942 = vld [vmem:[%s935 + $0x18] sm:$0xf]
  %v943 = vld [vmem:[%s935 + $0x1c] sm:$0xf]
  %v944 = vld [vmem:[%s935 + $0x20] sm:$0xf]
  %v945 = vld [vmem:[%s935 + $0x24] sm:$0xf]
  %v946 = vld [vmem:[%s935 + $0x28] sm:$0xf]
  %v947 = vld [vmem:[%s935 + $0x2c] sm:$0xf]
  %v948 = vld [vmem:[%s935 + $0x30] sm:$0xf]
  %v949 = vld [vmem:[%s935 + $0x34] sm:$0xf]
  %v950 = vld [vmem:[%s935 + $0x38] sm:$0xf]
  %v951 = vld [vmem:[%s935 + $0x3c] sm:$0xf]
  %v952 = vld [vmem:[%s935 + $0x40] sm:$0xf]
  %v953 = vld [vmem:[%s935 + $0x44] sm:$0xf]
  %v954 = vld [vmem:[%s935 + $0x48] sm:$0xf]
  %v955 = vld [vmem:[%s935 + $0x4c] sm:$0xf]
  %v956 = vld [vmem:[%s935 + $0x50] sm:$0xf]
  %v957 = vld [vmem:[%s935 + $0x54] sm:$0xf]
  %v958 = vld [vmem:[%s935 + $0x58] sm:$0xf]
  %v959 = vld [vmem:[%s935 + $0x5c] sm:$0xf]
  %v960 = vld [vmem:[%s935 + $0x60] sm:$0xf]
  %v961 = vld [vmem:[%s935 + $0x64] sm:$0xf]
  %v962 = vld [vmem:[%s935 + $0x68] sm:$0xf]
  %v963 = vld [vmem:[%s935 + $0x6c] sm:$0xf]
  %v964 = vld [vmem:[%s935 + $0x70] sm:$0xf]
  %v965 = vld [vmem:[%s935 + $0x74] sm:$0xf]
  %v966 = vld [vmem:[%s935 + $0x78] sm:$0xf]
  %v967 = vld [vmem:[%s935 + $0x7c] sm:$0xf]
  %s968 = scalar_lea.vmem %s3, 2
  %v969 = vld [vmem:[%s968] sm:$0x1]
  %v971 = vlaneseq
  %v972 = vshrl.u32 %v971, 7
  %v973 = vsub.s32 0, %v972
  %v974 = vrot.slane %v969, %v973
  %v1008 = vunpack.c.l.b16 %v936
  %v1009 = vunpack.c.l.b16 %v937
  %v1010 = vunpack.c.l.b16 %v938
  %v1011 = vunpack.c.l.b16 %v939
  %v1012 = vunpack.c.l.b16 %v940
  %v1013 = vunpack.c.l.b16 %v941
  %v1014 = vunpack.c.l.b16 %v942
  %v1015 = vunpack.c.l.b16 %v943
  %v1016 = vunpack.c.l.b16 %v944
  %v1017 = vunpack.c.l.b16 %v945
  %v1018 = vunpack.c.l.b16 %v946
  %v1019 = vunpack.c.l.b16 %v947
  %v1020 = vunpack.c.l.b16 %v948
  %v1021 = vunpack.c.l.b16 %v949
  %v1022 = vunpack.c.l.b16 %v950
  %v1023 = vunpack.c.l.b16 %v951
  %v1024 = vunpack.c.l.b16 %v952
  %v1025 = vunpack.c.l.b16 %v953
  %v1026 = vunpack.c.l.b16 %v954
  %v1027 = vunpack.c.l.b16 %v955
  %v1028 = vunpack.c.l.b16 %v956
  %v1029 = vunpack.c.l.b16 %v957
  %v1030 = vunpack.c.l.b16 %v958
  %v1031 = vunpack.c.l.b16 %v959
  %v1032 = vunpack.c.l.b16 %v960
  %v1033 = vunpack.c.l.b16 %v961
  %v1034 = vunpack.c.l.b16 %v962
  %v1035 = vunpack.c.l.b16 %v963
  %v1036 = vunpack.c.l.b16 %v964
  %v1037 = vunpack.c.l.b16 %v965
  %v1038 = vunpack.c.l.b16 %v966
  %v1039 = vunpack.c.l.b16 %v967
  %v1040 = vpack.c.b16 %v1009, %v1008
  %v1041 = vpack.c.b16 %v1011, %v1010
  %v1042 = vpack.c.b16 %v1013, %v1012
  %v1043 = vpack.c.b16 %v1015, %v1014
  %v1044 = vpack.c.b16 %v1017, %v1016
  %v1045 = vpack.c.b16 %v1019, %v1018
  %v1046 = vpack.c.b16 %v1021, %v1020
  %v1047 = vpack.c.b16 %v1023, %v1022
  %v1048 = vpack.c.b16 %v1025, %v1024
  %v1049 = vpack.c.b16 %v1027, %v1026
  %v1050 = vpack.c.b16 %v1029, %v1028
  %v1051 = vpack.c.b16 %v1031, %v1030
  %v1052 = vpack.c.b16 %v1033, %v1032
  %v1053 = vpack.c.b16 %v1035, %v1034
  %v1054 = vpack.c.b16 %v1037, %v1036
  %v1055 = vpack.c.b16 %v1039, %v1038
  %1072 = vmatprep.subr.bf16.mxu0 0
  %1073 = vmatpush1.bf16.msra.mxu0 %v1047
  %1074 = vmatprep.subr.bf16.mxu0 0
  %1075 = vmatpush1.bf16.msra.mxu0 %v1046
  %1076 = vmatprep.subr.bf16.mxu0 0
  %1077 = vmatpush1.bf16.msra.mxu0 %v1045
  %1078 = vmatprep.subr.bf16.mxu0 0
  %1079 = vmatpush1.bf16.msra.mxu0 %v1044
  %1080 = vmatprep.subr.bf16.mxu0 0
  %1081 = vmatpush1.bf16.msra.mxu0 %v1043
  %1082 = vmatprep.subr.bf16.mxu0 0
  %1083 = vmatpush1.bf16.msra.mxu0 %v1042
  %1084 = vmatprep.subr.bf16.mxu0 0
  %1085 = vmatpush1.bf16.msra.mxu0 %v1041
  %1086 = vmatprep.subr.bf16.mxu0 0
  %1087 = vmatpush1.bf16.msra.mxu0 %v1040
  %1088 = vmatprep.subr.bf16.mxu0 0
  %1089 = vmatpush2.bf16.msra.mxu0 %v1055
  %1090 = vmatprep.subr.bf16.mxu0 0
  %1091 = vmatpush2.bf16.msra.mxu0 %v1054
  %1092 = vmatprep.subr.bf16.mxu0 0
  %1093 = vmatpush2.bf16.msra.mxu0 %v1053
  %1094 = vmatprep.subr.bf16.mxu0 0
  %1095 = vmatpush2.bf16.msra.mxu0 %v1052
  %1096 = vmatprep.subr.bf16.mxu0 0
  %1097 = vmatpush2.bf16.msra.mxu0 %v1051
  %1098 = vmatprep.subr.bf16.mxu0 0
  %1099 = vmatpush2.bf16.msra.mxu0 %v1050
  %1100 = vmatprep.subr.bf16.mxu0 0
  %1101 = vmatpush2.bf16.msra.mxu0 %v1049
  %1102 = vmatprep.subr.bf16.mxu0 0
  %1103 = vmatpush2.bf16.msra.mxu0 %v1048
  %1104 = vmatprep.mubr.bf16.mxu0 %v927
  %1105 = vmatmul.mubr.bf16.gmra.mxu0 %v822
  %v1106 = vpop.f32.mrf.mxu0
  %v1107 = vadd.f32 %v974, %v1106
  %v1108 = vpop.f32.mrf.mxu0
  %v1109 = vpop.f32.mrf.mxu0
  %v1110 = vadd.f32 %v974, %v1109
  %v1111 = vpop.f32.mrf.mxu0
  %1112 = vmatprep.mubr.bf16.mxu0 %v928
  %1113 = vmatmul.mubr.bf16.gmra.mxu0 %v823
  %v1114 = vpop.f32.mrf.mxu0
  %v1115 = vadd.f32 %v974, %v1114
  %v1116 = vpop.f32.mrf.mxu0
  %v1117 = vpop.f32.mrf.mxu0
  %v1118 = vadd.f32 %v974, %v1117
  %v1119 = vpop.f32.mrf.mxu0
  %1120 = vmatprep.mubr.bf16.mxu0 %v929
  %1121 = vmatmul.mubr.bf16.gmra.mxu0 %v824
  %v1122 = vpop.f32.mrf.mxu0
  %v1123 = vadd.f32 %v974, %v1122
  %v1124 = vpop.f32.mrf.mxu0
  %v1125 = vpop.f32.mrf.mxu0
  %v1126 = vadd.f32 %v974, %v1125
  %v1127 = vpop.f32.mrf.mxu0
  %1128 = vmatprep.mubr.bf16.mxu0 %v930
  %1129 = vmatmul.mubr.bf16.gmra.mxu0 %v825
  %v1130 = vpop.f32.mrf.mxu0
  %v1131 = vadd.f32 %v974, %v1130
  %v1132 = vpop.f32.mrf.mxu0
  %v1133 = vpop.f32.mrf.mxu0
  %v1134 = vadd.f32 %v974, %v1133
  %v1135 = vpop.f32.mrf.mxu0
  %1136 = vmatprep.mubr.bf16.mxu0 %v931
  %1137 = vmatmul.mubr.bf16.gmra.mxu0 %v826
  %v1138 = vpop.f32.mrf.mxu0
  %v1139 = vadd.f32 %v974, %v1138
  %v1140 = vpop.f32.mrf.mxu0
  %v1141 = vpop.f32.mrf.mxu0
  %v1142 = vadd.f32 %v974, %v1141
  %v1143 = vpop.f32.mrf.mxu0
  %1144 = vmatprep.mubr.bf16.mxu0 %v932
  %1145 = vmatmul.mubr.bf16.gmra.mxu0 %v827
  %v1146 = vpop.f32.mrf.mxu0
  %v1147 = vadd.f32 %v974, %v1146
  %v1148 = vpop.f32.mrf.mxu0
  %v1149 = vpop.f32.mrf.mxu0
  %v1150 = vadd.f32 %v974, %v1149
  %v1151 = vpop.f32.mrf.mxu0
  %1152 = vmatprep.mubr.bf16.mxu0 %v933
  %1153 = vmatmul.mubr.bf16.gmra.mxu0 %v828
  %v1154 = vpop.f32.mrf.mxu0
  %v1155 = vadd.f32 %v974, %v1154
  %v1156 = vpop.f32.mrf.mxu0
  %v1157 = vpop.f32.mrf.mxu0
  %v1158 = vadd.f32 %v974, %v1157
  %v1159 = vpop.f32.mrf.mxu0
  %1160 = vmatprep.mubr.bf16.mxu0 %v934
  %1161 = vmatmul.mubr.bf16.gmra.mxu0 %v829
  %v1162 = vpop.f32.mrf.mxu0
  %v1163 = vadd.f32 %v974, %v1162
  %v1164 = vpop.f32.mrf.mxu0
  %v1165 = vpop.f32.mrf.mxu0
  %v1166 = vadd.f32 %v974, %v1165
  %v1167 = vpop.f32.mrf.mxu0
  %1168 = vdwg.mxu0
  %v1169 = vmax.f32 %v1107, 0.0
  %v1170 = vmax.f32 %v1110, 0.0
  %v1171 = vmax.f32 %v1115, 0.0
  %v1172 = vmax.f32 %v1118, 0.0
  %v1173 = vmax.f32 %v1123, 0.0
  %v1174 = vmax.f32 %v1126, 0.0
  %v1175 = vmax.f32 %v1131, 0.0
  %v1176 = vmax.f32 %v1134, 0.0
  %v1177 = vmax.f32 %v1139, 0.0
  %v1178 = vmax.f32 %v1142, 0.0
  %v1179 = vmax.f32 %v1147, 0.0
  %v1180 = vmax.f32 %v1150, 0.0
  %v1181 = vmax.f32 %v1155, 0.0
  %v1182 = vmax.f32 %v1158, 0.0
  %v1183 = vmax.f32 %v1163, 0.0
  %v1184 = vmax.f32 %v1166, 0.0
  %v1185 = vpack.c.bf16 %v1170, %v1169
  %v1186 = vpack.c.bf16 %v1172, %v1171
  %v1187 = vpack.c.bf16 %v1174, %v1173
  %v1188 = vpack.c.bf16 %v1176, %v1175
  %v1189 = vpack.c.bf16 %v1178, %v1177
  %v1190 = vpack.c.bf16 %v1180, %v1179
  %v1191 = vpack.c.bf16 %v1182, %v1181
  %v1192 = vpack.c.bf16 %v1184, %v1183
  %1193 = vmatprep.subr.bf16.mxu0 0
  %1194 = vmatpush1.bf16.msra.mxu0 %v1192
  %1195 = vmatprep.subr.bf16.mxu0 0
  %1196 = vmatpush1.bf16.msra.mxu0 %v1191
  %1197 = vmatprep.subr.bf16.mxu0 0
  %1198 = vmatpush1.bf16.msra.mxu0 %v1190
  %1199 = vmatprep.subr.bf16.mxu0 0
  %1200 = vmatpush1.bf16.msra.mxu0 %v1189
  %1201 = vmatprep.subr.bf16.mxu0 0
  %1202 = vmatpush1.bf16.msra.mxu0 %v1188
  %1203 = vmatprep.subr.bf16.mxu0 0
  %1204 = vmatpush1.bf16.msra.mxu0 %v1187
  %1205 = vmatprep.subr.bf16.mxu0 0
  %1206 = vmatpush1.bf16.msra.mxu0 %v1186
  %1207 = vmatprep.subr.bf16.mxu0 0
  %1208 = vmatpush1.bf16.msra.mxu0 %v1185
  %1209 = vmatprep.subr.bf16.mxu0 0
  %1210 = vmatpush2.bf16.msra.mxu0 0
  %1211 = vmatprep.subr.bf16.mxu0 0
  %1212 = vmatpush2.bf16.msra.mxu0 0
  %1213 = vmatprep.subr.bf16.mxu0 0
  %1214 = vmatpush2.bf16.msra.mxu0 0
  %1215 = vmatprep.subr.bf16.mxu0 0
  %1216 = vmatpush2.bf16.msra.mxu0 0
  %1217 = vmatprep.subr.bf16.mxu0 0
  %1218 = vmatpush2.bf16.msra.mxu0 0
  %1219 = vmatprep.subr.bf16.mxu0 0
  %1220 = vmatpush2.bf16.msra.mxu0 0
  %1221 = vmatprep.subr.bf16.mxu0 0
  %1222 = vmatpush2.bf16.msra.mxu0 0
  %1223 = vmatprep.subr.bf16.mxu0 0
  %1224 = vmatpush2.bf16.msra.mxu0 0
  %1225 = vmatprep.mubr.bf16.mxu0 0
  %1226 = vmatmul.mubr.bf16.gmra.mxu0 %v90
  %v1227 = vpop.f32.mrf.mxu0
  %v1228 = vadd.f32 0.0, %v1227
  %v1229 = vpop.f32.mrf.mxu0
  %v1230 = vpop.f32.mrf.mxu0
  %v1231 = vadd.f32 0.0, %v1230
  %v1232 = vpop.f32.mrf.mxu0
  %1233 = vmatprep.mubr.bf16.mxu0 0
  %1234 = vmatmul.mubr.bf16.gmra.mxu0 %v91
  %v1235 = vpop.f32.mrf.mxu0
  %v1236 = vadd.f32 0.0, %v1235
  %v1237 = vpop.f32.mrf.mxu0
  %v1238 = vpop.f32.mrf.mxu0
  %v1239 = vadd.f32 0.0, %v1238
  %v1240 = vpop.f32.mrf.mxu0
  %1241 = vmatprep.mubr.bf16.mxu0 0
  %1242 = vmatmul.mubr.bf16.gmra.mxu0 %v92
  %v1243 = vpop.f32.mrf.mxu0
  %v1244 = vadd.f32 0.0, %v1243
  %v1245 = vpop.f32.mrf.mxu0
  %v1246 = vpop.f32.mrf.mxu0
  %v1247 = vadd.f32 0.0, %v1246
  %v1248 = vpop.f32.mrf.mxu0
  %1249 = vmatprep.mubr.bf16.mxu0 0
  %1250 = vmatmul.mubr.bf16.gmra.mxu0 %v93
  %v1251 = vpop.f32.mrf.mxu0
  %v1252 = vadd.f32 0.0, %v1251
  %v1253 = vpop.f32.mrf.mxu0
  %v1254 = vpop.f32.mrf.mxu0
  %v1255 = vadd.f32 0.0, %v1254
  %v1256 = vpop.f32.mrf.mxu0
  %1257 = vmatprep.mubr.bf16.mxu0 0
  %1258 = vmatmul.mubr.bf16.gmra.mxu0 %v94
  %v1259 = vpop.f32.mrf.mxu0
  %v1260 = vadd.f32 0.0, %v1259
  %v1261 = vpop.f32.mrf.mxu0
  %v1262 = vpop.f32.mrf.mxu0
  %v1263 = vadd.f32 0.0, %v1262
  %v1264 = vpop.f32.mrf.mxu0
  %1265 = vmatprep.mubr.bf16.mxu0 0
  %1266 = vmatmul.mubr.bf16.gmra.mxu0 %v95
  %v1267 = vpop.f32.mrf.mxu0
  %v1268 = vadd.f32 0.0, %v1267
  %v1269 = vpop.f32.mrf.mxu0
  %v1270 = vpop.f32.mrf.mxu0
  %v1271 = vadd.f32 0.0, %v1270
  %v1272 = vpop.f32.mrf.mxu0
  %1273 = vmatprep.mubr.bf16.mxu0 0
  %1274 = vmatmul.mubr.bf16.gmra.mxu0 %v96
  %v1275 = vpop.f32.mrf.mxu0
  %v1276 = vadd.f32 0.0, %v1275
  %v1277 = vpop.f32.mrf.mxu0
  %v1278 = vpop.f32.mrf.mxu0
  %v1279 = vadd.f32 0.0, %v1278
  %v1280 = vpop.f32.mrf.mxu0
  %1281 = vmatprep.mubr.bf16.mxu0 0
  %1282 = vmatmul.mubr.bf16.gmra.mxu0 %v97
  %v1283 = vpop.f32.mrf.mxu0
  %v1284 = vadd.f32 0.0, %v1283
  %v1285 = vpop.f32.mrf.mxu0
  %v1286 = vpop.f32.mrf.mxu0
  %v1287 = vadd.f32 0.0, %v1286
  %v1288 = vpop.f32.mrf.mxu0
  %1289 = vdwg.mxu0
  %v1290 = vpack.c.bf16 %v1231, %v1228
  %v1291 = vpack.c.bf16 %v1239, %v1236
  %v1292 = vpack.c.bf16 %v1247, %v1244
  %v1293 = vpack.c.bf16 %v1255, %v1252
  %v1294 = vpack.c.bf16 %v1263, %v1260
  %v1295 = vpack.c.bf16 %v1271, %v1268
  %v1296 = vpack.c.bf16 %v1279, %v1276
  %v1297 = vpack.c.bf16 %v1287, %v1284
  %s1298 = scalar_lea.vmem %s2, 384
  %v1299 = vld [vmem:[%s1298] sm:$0xf]
  %v1300 = vld [vmem:[%s1298 + $0x4] sm:$0xf]
  %v1301 = vld [vmem:[%s1298 + $0x8] sm:$0xf]
  %v1302 = vld [vmem:[%s1298 + $0xc] sm:$0xf]
  %v1303 = vld [vmem:[%s1298 + $0x10] sm:$0xf]
  %v1304 = vld [vmem:[%s1298 + $0x14] sm:$0xf]
  %v1305 = vld [vmem:[%s1298 + $0x18] sm:$0xf]
  %v1306 = vld [vmem:[%s1298 + $0x1c] sm:$0xf]
  %v1307 = vld [vmem:[%s1298 + $0x20] sm:$0xf]
  %v1308 = vld [vmem:[%s1298 + $0x24] sm:$0xf]
  %v1309 = vld [vmem:[%s1298 + $0x28] sm:$0xf]
  %v1310 = vld [vmem:[%s1298 + $0x2c] sm:$0xf]
  %v1311 = vld [vmem:[%s1298 + $0x30] sm:$0xf]
  %v1312 = vld [vmem:[%s1298 + $0x34] sm:$0xf]
  %v1313 = vld [vmem:[%s1298 + $0x38] sm:$0xf]
  %v1314 = vld [vmem:[%s1298 + $0x3c] sm:$0xf]
  %v1315 = vld [vmem:[%s1298 + $0x40] sm:$0xf]
  %v1316 = vld [vmem:[%s1298 + $0x44] sm:$0xf]
  %v1317 = vld [vmem:[%s1298 + $0x48] sm:$0xf]
  %v1318 = vld [vmem:[%s1298 + $0x4c] sm:$0xf]
  %v1319 = vld [vmem:[%s1298 + $0x50] sm:$0xf]
  %v1320 = vld [vmem:[%s1298 + $0x54] sm:$0xf]
  %v1321 = vld [vmem:[%s1298 + $0x58] sm:$0xf]
  %v1322 = vld [vmem:[%s1298 + $0x5c] sm:$0xf]
  %v1323 = vld [vmem:[%s1298 + $0x60] sm:$0xf]
  %v1324 = vld [vmem:[%s1298 + $0x64] sm:$0xf]
  %v1325 = vld [vmem:[%s1298 + $0x68] sm:$0xf]
  %v1326 = vld [vmem:[%s1298 + $0x6c] sm:$0xf]
  %v1327 = vld [vmem:[%s1298 + $0x70] sm:$0xf]
  %v1328 = vld [vmem:[%s1298 + $0x74] sm:$0xf]
  %v1329 = vld [vmem:[%s1298 + $0x78] sm:$0xf]
  %v1330 = vld [vmem:[%s1298 + $0x7c] sm:$0xf]
  %s1331 = scalar_lea.vmem %s3, 3
  %v1332 = vld [vmem:[%s1331] sm:$0x1]
  %v1334 = vlaneseq
  %v1335 = vshrl.u32 %v1334, 7
  %v1336 = vsub.s32 0, %v1335
  %v1337 = vrot.slane %v1332, %v1336
  %v1371 = vunpack.c.l.b16 %v1299
  %v1372 = vunpack.c.l.b16 %v1300
  %v1373 = vunpack.c.l.b16 %v1301
  %v1374 = vunpack.c.l.b16 %v1302
  %v1375 = vunpack.c.l.b16 %v1303
  %v1376 = vunpack.c.l.b16 %v1304
  %v1377 = vunpack.c.l.b16 %v1305
  %v1378 = vunpack.c.l.b16 %v1306
  %v1379 = vunpack.c.l.b16 %v1307
  %v1380 = vunpack.c.l.b16 %v1308
  %v1381 = vunpack.c.l.b16 %v1309
  %v1382 = vunpack.c.l.b16 %v1310
  %v1383 = vunpack.c.l.b16 %v1311
  %v1384 = vunpack.c.l.b16 %v1312
  %v1385 = vunpack.c.l.b16 %v1313
  %v1386 = vunpack.c.l.b16 %v1314
  %v1387 = vunpack.c.l.b16 %v1315
  %v1388 = vunpack.c.l.b16 %v1316
  %v1389 = vunpack.c.l.b16 %v1317
  %v1390 = vunpack.c.l.b16 %v1318
  %v1391 = vunpack.c.l.b16 %v1319
  %v1392 = vunpack.c.l.b16 %v1320
  %v1393 = vunpack.c.l.b16 %v1321
  %v1394 = vunpack.c.l.b16 %v1322
  %v1395 = vunpack.c.l.b16 %v1323
  %v1396 = vunpack.c.l.b16 %v1324
  %v1397 = vunpack.c.l.b16 %v1325
  %v1398 = vunpack.c.l.b16 %v1326
  %v1399 = vunpack.c.l.b16 %v1327
  %v1400 = vunpack.c.l.b16 %v1328
  %v1401 = vunpack.c.l.b16 %v1329
  %v1402 = vunpack.c.l.b16 %v1330
  %v1403 = vpack.c.b16 %v1372, %v1371
  %v1404 = vpack.c.b16 %v1374, %v1373
  %v1405 = vpack.c.b16 %v1376, %v1375
  %v1406 = vpack.c.b16 %v1378, %v1377
  %v1407 = vpack.c.b16 %v1380, %v1379
  %v1408 = vpack.c.b16 %v1382, %v1381
  %v1409 = vpack.c.b16 %v1384, %v1383
  %v1410 = vpack.c.b16 %v1386, %v1385
  %v1411 = vpack.c.b16 %v1388, %v1387
  %v1412 = vpack.c.b16 %v1390, %v1389
  %v1413 = vpack.c.b16 %v1392, %v1391
  %v1414 = vpack.c.b16 %v1394, %v1393
  %v1415 = vpack.c.b16 %v1396, %v1395
  %v1416 = vpack.c.b16 %v1398, %v1397
  %v1417 = vpack.c.b16 %v1400, %v1399
  %v1418 = vpack.c.b16 %v1402, %v1401
  %1435 = vmatprep.subr.bf16.mxu0 0
  %1436 = vmatpush1.bf16.msra.mxu0 %v1410
  %1437 = vmatprep.subr.bf16.mxu0 0
  %1438 = vmatpush1.bf16.msra.mxu0 %v1409
  %1439 = vmatprep.subr.bf16.mxu0 0
  %1440 = vmatpush1.bf16.msra.mxu0 %v1408
  %1441 = vmatprep.subr.bf16.mxu0 0
  %1442 = vmatpush1.bf16.msra.mxu0 %v1407
  %1443 = vmatprep.subr.bf16.mxu0 0
  %1444 = vmatpush1.bf16.msra.mxu0 %v1406
  %1445 = vmatprep.subr.bf16.mxu0 0
  %1446 = vmatpush1.bf16.msra.mxu0 %v1405
  %1447 = vmatprep.subr.bf16.mxu0 0
  %1448 = vmatpush1.bf16.msra.mxu0 %v1404
  %1449 = vmatprep.subr.bf16.mxu0 0
  %1450 = vmatpush1.bf16.msra.mxu0 %v1403
  %1451 = vmatprep.subr.bf16.mxu0 0
  %1452 = vmatpush2.bf16.msra.mxu0 %v1418
  %1453 = vmatprep.subr.bf16.mxu0 0
  %1454 = vmatpush2.bf16.msra.mxu0 %v1417
  %1455 = vmatprep.subr.bf16.mxu0 0
  %1456 = vmatpush2.bf16.msra.mxu0 %v1416
  %1457 = vmatprep.subr.bf16.mxu0 0
  %1458 = vmatpush2.bf16.msra.mxu0 %v1415
  %1459 = vmatprep.subr.bf16.mxu0 0
  %1460 = vmatpush2.bf16.msra.mxu0 %v1414
  %1461 = vmatprep.subr.bf16.mxu0 0
  %1462 = vmatpush2.bf16.msra.mxu0 %v1413
  %1463 = vmatprep.subr.bf16.mxu0 0
  %1464 = vmatpush2.bf16.msra.mxu0 %v1412
  %1465 = vmatprep.subr.bf16.mxu0 0
  %1466 = vmatpush2.bf16.msra.mxu0 %v1411
  %1467 = vmatprep.mubr.bf16.mxu0 %v1290
  %1468 = vmatmul.mubr.bf16.gmra.mxu0 %v1185
  %v1469 = vpop.f32.mrf.mxu0
  %v1470 = vadd.f32 %v1337, %v1469
  %v1471 = vpop.f32.mrf.mxu0
  %v1472 = vpop.f32.mrf.mxu0
  %v1473 = vadd.f32 %v1337, %v1472
  %v1474 = vpop.f32.mrf.mxu0
  %1475 = vmatprep.mubr.bf16.mxu0 %v1291
  %1476 = vmatmul.mubr.bf16.gmra.mxu0 %v1186
  %v1477 = vpop.f32.mrf.mxu0
  %v1478 = vadd.f32 %v1337, %v1477
  %v1479 = vpop.f32.mrf.mxu0
  %v1480 = vpop.f32.mrf.mxu0
  %v1481 = vadd.f32 %v1337, %v1480
  %v1482 = vpop.f32.mrf.mxu0
  %1483 = vmatprep.mubr.bf16.mxu0 %v1292
  %1484 = vmatmul.mubr.bf16.gmra.mxu0 %v1187
  %v1485 = vpop.f32.mrf.mxu0
  %v1486 = vadd.f32 %v1337, %v1485
  %v1487 = vpop.f32.mrf.mxu0
  %v1488 = vpop.f32.mrf.mxu0
  %v1489 = vadd.f32 %v1337, %v1488
  %v1490 = vpop.f32.mrf.mxu0
  %1491 = vmatprep.mubr.bf16.mxu0 %v1293
  %1492 = vmatmul.mubr.bf16.gmra.mxu0 %v1188
  %v1493 = vpop.f32.mrf.mxu0
  %v1494 = vadd.f32 %v1337, %v1493
  %v1495 = vpop.f32.mrf.mxu0
  %v1496 = vpop.f32.mrf.mxu0
  %v1497 = vadd.f32 %v1337, %v1496
  %v1498 = vpop.f32.mrf.mxu0
  %1499 = vmatprep.mubr.bf16.mxu0 %v1294
  %1500 = vmatmul.mubr.bf16.gmra.mxu0 %v1189
  %v1501 = vpop.f32.mrf.mxu0
  %v1502 = vadd.f32 %v1337, %v1501
  %v1503 = vpop.f32.mrf.mxu0
  %v1504 = vpop.f32.mrf.mxu0
  %v1505 = vadd.f32 %v1337, %v1504
  %v1506 = vpop.f32.mrf.mxu0
  %1507 = vmatprep.mubr.bf16.mxu0 %v1295
  %1508 = vmatmul.mubr.bf16.gmra.mxu0 %v1190
  %v1509 = vpop.f32.mrf.mxu0
  %v1510 = vadd.f32 %v1337, %v1509
  %v1511 = vpop.f32.mrf.mxu0
  %v1512 = vpop.f32.mrf.mxu0
  %v1513 = vadd.f32 %v1337, %v1512
  %v1514 = vpop.f32.mrf.mxu0
  %1515 = vmatprep.mubr.bf16.mxu0 %v1296
  %1516 = vmatmul.mubr.bf16.gmra.mxu0 %v1191
  %v1517 = vpop.f32.mrf.mxu0
  %v1518 = vadd.f32 %v1337, %v1517
  %v1519 = vpop.f32.mrf.mxu0
  %v1520 = vpop.f32.mrf.mxu0
  %v1521 = vadd.f32 %v1337, %v1520
  %v1522 = vpop.f32.mrf.mxu0
  %1523 = vmatprep.mubr.bf16.mxu0 %v1297
  %1524 = vmatmul.mubr.bf16.gmra.mxu0 %v1192
  %v1525 = vpop.f32.mrf.mxu0
  %v1526 = vadd.f32 %v1337, %v1525
  %v1527 = vpop.f32.mrf.mxu0
  %v1528 = vpop.f32.mrf.mxu0
  %v1529 = vadd.f32 %v1337, %v1528
  %v1530 = vpop.f32.mrf.mxu0
  %1531 = vdwg.mxu0
  %v1532 = vpack.c.bf16 %v1473, %v1470
  %v1533 = vpack.c.bf16 %v1481, %v1478
  %v1534 = vpack.c.bf16 %v1489, %v1486
  %v1535 = vpack.c.bf16 %v1497, %v1494
  %v1536 = vpack.c.bf16 %v1505, %v1502
  %v1537 = vpack.c.bf16 %v1513, %v1510
  %v1538 = vpack.c.bf16 %v1521, %v1518
  %v1539 = vpack.c.bf16 %v1529, %v1526
  %1540 = vmatprep.subr.bf16.mxu0 0
  %1541 = vmatpush1.bf16.msra.mxu0 %v1539
  %1542 = vmatprep.subr.bf16.mxu0 0
  %1543 = vmatpush1.bf16.msra.mxu0 %v1538
  %1544 = vmatprep.subr.bf16.mxu0 0
  %1545 = vmatpush1.bf16.msra.mxu0 %v1537
  %1546 = vmatprep.subr.bf16.mxu0 0
  %1547 = vmatpush1.bf16.msra.mxu0 %v1536
  %1548 = vmatprep.subr.bf16.mxu0 0
  %1549 = vmatpush1.bf16.msra.mxu0 %v1535
  %1550 = vmatprep.subr.bf16.mxu0 0
  %1551 = vmatpush1.bf16.msra.mxu0 %v1534
  %1552 = vmatprep.subr.bf16.mxu0 0
  %1553 = vmatpush1.bf16.msra.mxu0 %v1533
  %1554 = vmatprep.subr.bf16.mxu0 0
  %1555 = vmatpush1.bf16.msra.mxu0 %v1532
  %1556 = vmatprep.subr.bf16.mxu0 0
  %1557 = vmatpush2.bf16.msra.mxu0 0
  %1558 = vmatprep.subr.bf16.mxu0 0
  %1559 = vmatpush2.bf16.msra.mxu0 0
  %1560 = vmatprep.subr.bf16.mxu0 0
  %1561 = vmatpush2.bf16.msra.mxu0 0
  %1562 = vmatprep.subr.bf16.mxu0 0
  %1563 = vmatpush2.bf16.msra.mxu0 0
  %1564 = vmatprep.subr.bf16.mxu0 0
  %1565 = vmatpush2.bf16.msra.mxu0 0
  %1566 = vmatprep.subr.bf16.mxu0 0
  %1567 = vmatpush2.bf16.msra.mxu0 0
  %1568 = vmatprep.subr.bf16.mxu0 0
  %1569 = vmatpush2.bf16.msra.mxu0 0
  %1570 = vmatprep.subr.bf16.mxu0 0
  %1571 = vmatpush2.bf16.msra.mxu0 0
  %1572 = vmatprep.mubr.bf16.mxu0 0
  %1573 = vmatmul.mubr.bf16.gmra.mxu0 %v90
  %v1574 = vpop.f32.mrf.mxu0
  %v1575 = vadd.f32 0.0, %v1574
  %v1576 = vpop.f32.mrf.mxu0
  %v1577 = vpop.f32.mrf.mxu0
  %v1578 = vadd.f32 0.0, %v1577
  %v1579 = vpop.f32.mrf.mxu0
  %1580 = vmatprep.mubr.bf16.mxu0 0
  %1581 = vmatmul.mubr.bf16.gmra.mxu0 %v91
  %v1582 = vpop.f32.mrf.mxu0
  %v1583 = vadd.f32 0.0, %v1582
  %v1584 = vpop.f32.mrf.mxu0
  %v1585 = vpop.f32.mrf.mxu0
  %v1586 = vadd.f32 0.0, %v1585
  %v1587 = vpop.f32.mrf.mxu0
  %1588 = vmatprep.mubr.bf16.mxu0 0
  %1589 = vmatmul.mubr.bf16.gmra.mxu0 %v92
  %v1590 = vpop.f32.mrf.mxu0
  %v1591 = vadd.f32 0.0, %v1590
  %v1592 = vpop.f32.mrf.mxu0
  %v1593 = vpop.f32.mrf.mxu0
  %v1594 = vadd.f32 0.0, %v1593
  %v1595 = vpop.f32.mrf.mxu0
  %1596 = vmatprep.mubr.bf16.mxu0 0
  %1597 = vmatmul.mubr.bf16.gmra.mxu0 %v93
  %v1598 = vpop.f32.mrf.mxu0
  %v1599 = vadd.f32 0.0, %v1598
  %v1600 = vpop.f32.mrf.mxu0
  %v1601 = vpop.f32.mrf.mxu0
  %v1602 = vadd.f32 0.0, %v1601
  %v1603 = vpop.f32.mrf.mxu0
  %1604 = vmatprep.mubr.bf16.mxu0 0
  %1605 = vmatmul.mubr.bf16.gmra.mxu0 %v94
  %v1606 = vpop.f32.mrf.mxu0
  %v1607 = vadd.f32 0.0, %v1606
  %v1608 = vpop.f32.mrf.mxu0
  %v1609 = vpop.f32.mrf.mxu0
  %v1610 = vadd.f32 0.0, %v1609
  %v1611 = vpop.f32.mrf.mxu0
  %1612 = vmatprep.mubr.bf16.mxu0 0
  %1613 = vmatmul.mubr.bf16.gmra.mxu0 %v95
  %v1614 = vpop.f32.mrf.mxu0
  %v1615 = vadd.f32 0.0, %v1614
  %v1616 = vpop.f32.mrf.mxu0
  %v1617 = vpop.f32.mrf.mxu0
  %v1618 = vadd.f32 0.0, %v1617
  %v1619 = vpop.f32.mrf.mxu0
  %1620 = vmatprep.mubr.bf16.mxu0 0
  %1621 = vmatmul.mubr.bf16.gmra.mxu0 %v96
  %v1622 = vpop.f32.mrf.mxu0
  %v1623 = vadd.f32 0.0, %v1622
  %v1624 = vpop.f32.mrf.mxu0
  %v1625 = vpop.f32.mrf.mxu0
  %v1626 = vadd.f32 0.0, %v1625
  %v1627 = vpop.f32.mrf.mxu0
  %1628 = vmatprep.mubr.bf16.mxu0 0
  %1629 = vmatmul.mubr.bf16.gmra.mxu0 %v97
  %v1630 = vpop.f32.mrf.mxu0
  %v1631 = vadd.f32 0.0, %v1630
  %v1632 = vpop.f32.mrf.mxu0
  %v1633 = vpop.f32.mrf.mxu0
  %v1634 = vadd.f32 0.0, %v1633
  %v1635 = vpop.f32.mrf.mxu0
  %1636 = vdwg.mxu0
  %v1637 = vpack.c.bf16 %v1578, %v1575
  %v1638 = vpack.c.bf16 %v1586, %v1583
  %v1639 = vpack.c.bf16 %v1594, %v1591
  %v1640 = vpack.c.bf16 %v1602, %v1599
  %v1641 = vpack.c.bf16 %v1610, %v1607
  %v1642 = vpack.c.bf16 %v1618, %v1615
  %v1643 = vpack.c.bf16 %v1626, %v1623
  %v1644 = vpack.c.bf16 %v1634, %v1631
  %s1645 = scalar_lea.vmem %s2, 512
  %v1646 = vld [vmem:[%s1645] sm:$0xf]
  %v1647 = vld [vmem:[%s1645 + $0x4] sm:$0xf]
  %v1648 = vld [vmem:[%s1645 + $0x8] sm:$0xf]
  %v1649 = vld [vmem:[%s1645 + $0xc] sm:$0xf]
  %v1650 = vld [vmem:[%s1645 + $0x10] sm:$0xf]
  %v1651 = vld [vmem:[%s1645 + $0x14] sm:$0xf]
  %v1652 = vld [vmem:[%s1645 + $0x18] sm:$0xf]
  %v1653 = vld [vmem:[%s1645 + $0x1c] sm:$0xf]
  %v1654 = vld [vmem:[%s1645 + $0x20] sm:$0xf]
  %v1655 = vld [vmem:[%s1645 + $0x24] sm:$0xf]
  %v1656 = vld [vmem:[%s1645 + $0x28] sm:$0xf]
  %v1657 = vld [vmem:[%s1645 + $0x2c] sm:$0xf]
  %v1658 = vld [vmem:[%s1645 + $0x30] sm:$0xf]
  %v1659 = vld [vmem:[%s1645 + $0x34] sm:$0xf]
  %v1660 = vld [vmem:[%s1645 + $0x38] sm:$0xf]
  %v1661 = vld [vmem:[%s1645 + $0x3c] sm:$0xf]
  %v1662 = vld [vmem:[%s1645 + $0x40] sm:$0xf]
  %v1663 = vld [vmem:[%s1645 + $0x44] sm:$0xf]
  %v1664 = vld [vmem:[%s1645 + $0x48] sm:$0xf]
  %v1665 = vld [vmem:[%s1645 + $0x4c] sm:$0xf]
  %v1666 = vld [vmem:[%s1645 + $0x50] sm:$0xf]
  %v1667 = vld [vmem:[%s1645 + $0x54] sm:$0xf]
  %v1668 = vld [vmem:[%s1645 + $0x58] sm:$0xf]
  %v1669 = vld [vmem:[%s1645 + $0x5c] sm:$0xf]
  %v1670 = vld [vmem:[%s1645 + $0x60] sm:$0xf]
  %v1671 = vld [vmem:[%s1645 + $0x64] sm:$0xf]
  %v1672 = vld [vmem:[%s1645 + $0x68] sm:$0xf]
  %v1673 = vld [vmem:[%s1645 + $0x6c] sm:$0xf]
  %v1674 = vld [vmem:[%s1645 + $0x70] sm:$0xf]
  %v1675 = vld [vmem:[%s1645 + $0x74] sm:$0xf]
  %v1676 = vld [vmem:[%s1645 + $0x78] sm:$0xf]
  %v1677 = vld [vmem:[%s1645 + $0x7c] sm:$0xf]
  %s1678 = scalar_lea.vmem %s3, 4
  %v1679 = vld [vmem:[%s1678] sm:$0x1]
  %v1681 = vlaneseq
  %v1682 = vshrl.u32 %v1681, 7
  %v1683 = vsub.s32 0, %v1682
  %v1684 = vrot.slane %v1679, %v1683
  %v1718 = vunpack.c.l.b16 %v1646
  %v1719 = vunpack.c.l.b16 %v1647
  %v1720 = vunpack.c.l.b16 %v1648
  %v1721 = vunpack.c.l.b16 %v1649
  %v1722 = vunpack.c.l.b16 %v1650
  %v1723 = vunpack.c.l.b16 %v1651
  %v1724 = vunpack.c.l.b16 %v1652
  %v1725 = vunpack.c.l.b16 %v1653
  %v1726 = vunpack.c.l.b16 %v1654
  %v1727 = vunpack.c.l.b16 %v1655
  %v1728 = vunpack.c.l.b16 %v1656
  %v1729 = vunpack.c.l.b16 %v1657
  %v1730 = vunpack.c.l.b16 %v1658
  %v1731 = vunpack.c.l.b16 %v1659
  %v1732 = vunpack.c.l.b16 %v1660
  %v1733 = vunpack.c.l.b16 %v1661
  %v1734 = vunpack.c.l.b16 %v1662
  %v1735 = vunpack.c.l.b16 %v1663
  %v1736 = vunpack.c.l.b16 %v1664
  %v1737 = vunpack.c.l.b16 %v1665
  %v1738 = vunpack.c.l.b16 %v1666
  %v1739 = vunpack.c.l.b16 %v1667
  %v1740 = vunpack.c.l.b16 %v1668
  %v1741 = vunpack.c.l.b16 %v1669
  %v1742 = vunpack.c.l.b16 %v1670
  %v1743 = vunpack.c.l.b16 %v1671
  %v1744 = vunpack.c.l.b16 %v1672
  %v1745 = vunpack.c.l.b16 %v1673
  %v1746 = vunpack.c.l.b16 %v1674
  %v1747 = vunpack.c.l.b16 %v1675
  %v1748 = vunpack.c.l.b16 %v1676
  %v1749 = vunpack.c.l.b16 %v1677
  %v1750 = vpack.c.b16 %v1719, %v1718
  %v1751 = vpack.c.b16 %v1721, %v1720
  %v1752 = vpack.c.b16 %v1723, %v1722
  %v1753 = vpack.c.b16 %v1725, %v1724
  %v1754 = vpack.c.b16 %v1727, %v1726
  %v1755 = vpack.c.b16 %v1729, %v1728
  %v1756 = vpack.c.b16 %v1731, %v1730
  %v1757 = vpack.c.b16 %v1733, %v1732
  %v1758 = vpack.c.b16 %v1735, %v1734
  %v1759 = vpack.c.b16 %v1737, %v1736
  %v1760 = vpack.c.b16 %v1739, %v1738
  %v1761 = vpack.c.b16 %v1741, %v1740
  %v1762 = vpack.c.b16 %v1743, %v1742
  %v1763 = vpack.c.b16 %v1745, %v1744
  %v1764 = vpack.c.b16 %v1747, %v1746
  %v1765 = vpack.c.b16 %v1749, %v1748
  %1782 = vmatprep.subr.bf16.mxu0 0
  %1783 = vmatpush1.bf16.msra.mxu0 %v1757
  %1784 = vmatprep.subr.bf16.mxu0 0
  %1785 = vmatpush1.bf16.msra.mxu0 %v1756
  %1786 = vmatprep.subr.bf16.mxu0 0
  %1787 = vmatpush1.bf16.msra.mxu0 %v1755
  %1788 = vmatprep.subr.bf16.mxu0 0
  %1789 = vmatpush1.bf16.msra.mxu0 %v1754
  %1790 = vmatprep.subr.bf16.mxu0 0
  %1791 = vmatpush1.bf16.msra.mxu0 %v1753
  %1792 = vmatprep.subr.bf16.mxu0 0
  %1793 = vmatpush1.bf16.msra.mxu0 %v1752
  %1794 = vmatprep.subr.bf16.mxu0 0
  %1795 = vmatpush1.bf16.msra.mxu0 %v1751
  %1796 = vmatprep.subr.bf16.mxu0 0
  %1797 = vmatpush1.bf16.msra.mxu0 %v1750
  %1798 = vmatprep.subr.bf16.mxu0 0
  %1799 = vmatpush2.bf16.msra.mxu0 %v1765
  %1800 = vmatprep.subr.bf16.mxu0 0
  %1801 = vmatpush2.bf16.msra.mxu0 %v1764
  %1802 = vmatprep.subr.bf16.mxu0 0
  %1803 = vmatpush2.bf16.msra.mxu0 %v1763
  %1804 = vmatprep.subr.bf16.mxu0 0
  %1805 = vmatpush2.bf16.msra.mxu0 %v1762
  %1806 = vmatprep.subr.bf16.mxu0 0
  %1807 = vmatpush2.bf16.msra.mxu0 %v1761
  %1808 = vmatprep.subr.bf16.mxu0 0
  %1809 = vmatpush2.bf16.msra.mxu0 %v1760
  %1810 = vmatprep.subr.bf16.mxu0 0
  %1811 = vmatpush2.bf16.msra.mxu0 %v1759
  %1812 = vmatprep.subr.bf16.mxu0 0
  %1813 = vmatpush2.bf16.msra.mxu0 %v1758
  %1814 = vmatprep.mubr.bf16.mxu0 %v1637
  %1815 = vmatmul.mubr.bf16.gmra.mxu0 %v1532
  %v1816 = vpop.f32.mrf.mxu0
  %v1817 = vadd.f32 %v1684, %v1816
  %v1818 = vpop.f32.mrf.mxu0
  %v1819 = vpop.f32.mrf.mxu0
  %v1820 = vadd.f32 %v1684, %v1819
  %v1821 = vpop.f32.mrf.mxu0
  %1822 = vmatprep.mubr.bf16.mxu0 %v1638
  %1823 = vmatmul.mubr.bf16.gmra.mxu0 %v1533
  %v1824 = vpop.f32.mrf.mxu0
  %v1825 = vadd.f32 %v1684, %v1824
  %v1826 = vpop.f32.mrf.mxu0
  %v1827 = vpop.f32.mrf.mxu0
  %v1828 = vadd.f32 %v1684, %v1827
  %v1829 = vpop.f32.mrf.mxu0
  %1830 = vmatprep.mubr.bf16.mxu0 %v1639
  %1831 = vmatmul.mubr.bf16.gmra.mxu0 %v1534
  %v1832 = vpop.f32.mrf.mxu0
  %v1833 = vadd.f32 %v1684, %v1832
  %v1834 = vpop.f32.mrf.mxu0
  %v1835 = vpop.f32.mrf.mxu0
  %v1836 = vadd.f32 %v1684, %v1835
  %v1837 = vpop.f32.mrf.mxu0
  %1838 = vmatprep.mubr.bf16.mxu0 %v1640
  %1839 = vmatmul.mubr.bf16.gmra.mxu0 %v1535
  %v1840 = vpop.f32.mrf.mxu0
  %v1841 = vadd.f32 %v1684, %v1840
  %v1842 = vpop.f32.mrf.mxu0
  %v1843 = vpop.f32.mrf.mxu0
  %v1844 = vadd.f32 %v1684, %v1843
  %v1845 = vpop.f32.mrf.mxu0
  %1846 = vmatprep.mubr.bf16.mxu0 %v1641
  %1847 = vmatmul.mubr.bf16.gmra.mxu0 %v1536
  %v1848 = vpop.f32.mrf.mxu0
  %v1849 = vadd.f32 %v1684, %v1848
  %v1850 = vpop.f32.mrf.mxu0
  %v1851 = vpop.f32.mrf.mxu0
  %v1852 = vadd.f32 %v1684, %v1851
  %v1853 = vpop.f32.mrf.mxu0
  %1854 = vmatprep.mubr.bf16.mxu0 %v1642
  %1855 = vmatmul.mubr.bf16.gmra.mxu0 %v1537
  %v1856 = vpop.f32.mrf.mxu0
  %v1857 = vadd.f32 %v1684, %v1856
  %v1858 = vpop.f32.mrf.mxu0
  %v1859 = vpop.f32.mrf.mxu0
  %v1860 = vadd.f32 %v1684, %v1859
  %v1861 = vpop.f32.mrf.mxu0
  %1862 = vmatprep.mubr.bf16.mxu0 %v1643
  %1863 = vmatmul.mubr.bf16.gmra.mxu0 %v1538
  %v1864 = vpop.f32.mrf.mxu0
  %v1865 = vadd.f32 %v1684, %v1864
  %v1866 = vpop.f32.mrf.mxu0
  %v1867 = vpop.f32.mrf.mxu0
  %v1868 = vadd.f32 %v1684, %v1867
  %v1869 = vpop.f32.mrf.mxu0
  %1870 = vmatprep.mubr.bf16.mxu0 %v1644
  %1871 = vmatmul.mubr.bf16.gmra.mxu0 %v1539
  %v1872 = vpop.f32.mrf.mxu0
  %v1873 = vadd.f32 %v1684, %v1872
  %v1874 = vpop.f32.mrf.mxu0
  %v1875 = vpop.f32.mrf.mxu0
  %v1876 = vadd.f32 %v1684, %v1875
  %v1877 = vpop.f32.mrf.mxu0
  %1878 = vdwg.mxu0
  %v1879 = vmax.f32 %v1817, 0.0
  %v1880 = vmax.f32 %v1820, 0.0
  %v1881 = vmax.f32 %v1825, 0.0
  %v1882 = vmax.f32 %v1828, 0.0
  %v1883 = vmax.f32 %v1833, 0.0
  %v1884 = vmax.f32 %v1836, 0.0
  %v1885 = vmax.f32 %v1841, 0.0
  %v1886 = vmax.f32 %v1844, 0.0
  %v1887 = vmax.f32 %v1849, 0.0
  %v1888 = vmax.f32 %v1852, 0.0
  %v1889 = vmax.f32 %v1857, 0.0
  %v1890 = vmax.f32 %v1860, 0.0
  %v1891 = vmax.f32 %v1865, 0.0
  %v1892 = vmax.f32 %v1868, 0.0
  %v1893 = vmax.f32 %v1873, 0.0
  %v1894 = vmax.f32 %v1876, 0.0
  %v1895 = vpack.c.bf16 %v1880, %v1879
  %v1896 = vpack.c.bf16 %v1882, %v1881
  %v1897 = vpack.c.bf16 %v1884, %v1883
  %v1898 = vpack.c.bf16 %v1886, %v1885
  %v1899 = vpack.c.bf16 %v1888, %v1887
  %v1900 = vpack.c.bf16 %v1890, %v1889
  %v1901 = vpack.c.bf16 %v1892, %v1891
  %v1902 = vpack.c.bf16 %v1894, %v1893
  %1903 = vmatprep.subr.bf16.mxu0 0
  %1904 = vmatpush1.bf16.msra.mxu0 %v1902
  %1905 = vmatprep.subr.bf16.mxu0 0
  %1906 = vmatpush1.bf16.msra.mxu0 %v1901
  %1907 = vmatprep.subr.bf16.mxu0 0
  %1908 = vmatpush1.bf16.msra.mxu0 %v1900
  %1909 = vmatprep.subr.bf16.mxu0 0
  %1910 = vmatpush1.bf16.msra.mxu0 %v1899
  %1911 = vmatprep.subr.bf16.mxu0 0
  %1912 = vmatpush1.bf16.msra.mxu0 %v1898
  %1913 = vmatprep.subr.bf16.mxu0 0
  %1914 = vmatpush1.bf16.msra.mxu0 %v1897
  %1915 = vmatprep.subr.bf16.mxu0 0
  %1916 = vmatpush1.bf16.msra.mxu0 %v1896
  %1917 = vmatprep.subr.bf16.mxu0 0
  %1918 = vmatpush1.bf16.msra.mxu0 %v1895
  %1919 = vmatprep.subr.bf16.mxu0 0
  %1920 = vmatpush2.bf16.msra.mxu0 0
  %1921 = vmatprep.subr.bf16.mxu0 0
  %1922 = vmatpush2.bf16.msra.mxu0 0
  %1923 = vmatprep.subr.bf16.mxu0 0
  %1924 = vmatpush2.bf16.msra.mxu0 0
  %1925 = vmatprep.subr.bf16.mxu0 0
  %1926 = vmatpush2.bf16.msra.mxu0 0
  %1927 = vmatprep.subr.bf16.mxu0 0
  %1928 = vmatpush2.bf16.msra.mxu0 0
  %1929 = vmatprep.subr.bf16.mxu0 0
  %1930 = vmatpush2.bf16.msra.mxu0 0
  %1931 = vmatprep.subr.bf16.mxu0 0
  %1932 = vmatpush2.bf16.msra.mxu0 0
  %1933 = vmatprep.subr.bf16.mxu0 0
  %1934 = vmatpush2.bf16.msra.mxu0 0
  %1935 = vmatprep.mubr.bf16.mxu0 0
  %1936 = vmatmul.mubr.bf16.gmra.mxu0 %v90
  %v1937 = vpop.f32.mrf.mxu0
  %v1938 = vadd.f32 0.0, %v1937
  %v1939 = vpop.f32.mrf.mxu0
  %v1940 = vpop.f32.mrf.mxu0
  %v1941 = vadd.f32 0.0, %v1940
  %v1942 = vpop.f32.mrf.mxu0
  %1943 = vmatprep.mubr.bf16.mxu0 0
  %1944 = vmatmul.mubr.bf16.gmra.mxu0 %v91
  %v1945 = vpop.f32.mrf.mxu0
  %v1946 = vadd.f32 0.0, %v1945
  %v1947 = vpop.f32.mrf.mxu0
  %v1948 = vpop.f32.mrf.mxu0
  %v1949 = vadd.f32 0.0, %v1948
  %v1950 = vpop.f32.mrf.mxu0
  %1951 = vmatprep.mubr.bf16.mxu0 0
  %1952 = vmatmul.mubr.bf16.gmra.mxu0 %v92
  %v1953 = vpop.f32.mrf.mxu0
  %v1954 = vadd.f32 0.0, %v1953
  %v1955 = vpop.f32.mrf.mxu0
  %v1956 = vpop.f32.mrf.mxu0
  %v1957 = vadd.f32 0.0, %v1956
  %v1958 = vpop.f32.mrf.mxu0
  %1959 = vmatprep.mubr.bf16.mxu0 0
  %1960 = vmatmul.mubr.bf16.gmra.mxu0 %v93
  %v1961 = vpop.f32.mrf.mxu0
  %v1962 = vadd.f32 0.0, %v1961
  %v1963 = vpop.f32.mrf.mxu0
  %v1964 = vpop.f32.mrf.mxu0
  %v1965 = vadd.f32 0.0, %v1964
  %v1966 = vpop.f32.mrf.mxu0
  %1967 = vmatprep.mubr.bf16.mxu0 0
  %1968 = vmatmul.mubr.bf16.gmra.mxu0 %v94
  %v1969 = vpop.f32.mrf.mxu0
  %v1970 = vadd.f32 0.0, %v1969
  %v1971 = vpop.f32.mrf.mxu0
  %v1972 = vpop.f32.mrf.mxu0
  %v1973 = vadd.f32 0.0, %v1972
  %v1974 = vpop.f32.mrf.mxu0
  %1975 = vmatprep.mubr.bf16.mxu0 0
  %1976 = vmatmul.mubr.bf16.gmra.mxu0 %v95
  %v1977 = vpop.f32.mrf.mxu0
  %v1978 = vadd.f32 0.0, %v1977
  %v1979 = vpop.f32.mrf.mxu0
  %v1980 = vpop.f32.mrf.mxu0
  %v1981 = vadd.f32 0.0, %v1980
  %v1982 = vpop.f32.mrf.mxu0
  %1983 = vmatprep.mubr.bf16.mxu0 0
  %1984 = vmatmul.mubr.bf16.gmra.mxu0 %v96
  %v1985 = vpop.f32.mrf.mxu0
  %v1986 = vadd.f32 0.0, %v1985
  %v1987 = vpop.f32.mrf.mxu0
  %v1988 = vpop.f32.mrf.mxu0
  %v1989 = vadd.f32 0.0, %v1988
  %v1990 = vpop.f32.mrf.mxu0
  %1991 = vmatprep.mubr.bf16.mxu0 0
  %1992 = vmatmul.mubr.bf16.gmra.mxu0 %v97
  %v1993 = vpop.f32.mrf.mxu0
  %v1994 = vadd.f32 0.0, %v1993
  %v1995 = vpop.f32.mrf.mxu0
  %v1996 = vpop.f32.mrf.mxu0
  %v1997 = vadd.f32 0.0, %v1996
  %v1998 = vpop.f32.mrf.mxu0
  %1999 = vdwg.mxu0
  %v2000 = vpack.c.bf16 %v1941, %v1938
  %v2001 = vpack.c.bf16 %v1949, %v1946
  %v2002 = vpack.c.bf16 %v1957, %v1954
  %v2003 = vpack.c.bf16 %v1965, %v1962
  %v2004 = vpack.c.bf16 %v1973, %v1970
  %v2005 = vpack.c.bf16 %v1981, %v1978
  %v2006 = vpack.c.bf16 %v1989, %v1986
  %v2007 = vpack.c.bf16 %v1997, %v1994
  %s2008 = scalar_lea.vmem %s2, 640
  %v2009 = vld [vmem:[%s2008] sm:$0xf]
  %v2010 = vld [vmem:[%s2008 + $0x4] sm:$0xf]
  %v2011 = vld [vmem:[%s2008 + $0x8] sm:$0xf]
  %v2012 = vld [vmem:[%s2008 + $0xc] sm:$0xf]
  %v2013 = vld [vmem:[%s2008 + $0x10] sm:$0xf]
  %v2014 = vld [vmem:[%s2008 + $0x14] sm:$0xf]
  %v2015 = vld [vmem:[%s2008 + $0x18] sm:$0xf]
  %v2016 = vld [vmem:[%s2008 + $0x1c] sm:$0xf]
  %v2017 = vld [vmem:[%s2008 + $0x20] sm:$0xf]
  %v2018 = vld [vmem:[%s2008 + $0x24] sm:$0xf]
  %v2019 = vld [vmem:[%s2008 + $0x28] sm:$0xf]
  %v2020 = vld [vmem:[%s2008 + $0x2c] sm:$0xf]
  %v2021 = vld [vmem:[%s2008 + $0x30] sm:$0xf]
  %v2022 = vld [vmem:[%s2008 + $0x34] sm:$0xf]
  %v2023 = vld [vmem:[%s2008 + $0x38] sm:$0xf]
  %v2024 = vld [vmem:[%s2008 + $0x3c] sm:$0xf]
  %v2025 = vld [vmem:[%s2008 + $0x40] sm:$0xf]
  %v2026 = vld [vmem:[%s2008 + $0x44] sm:$0xf]
  %v2027 = vld [vmem:[%s2008 + $0x48] sm:$0xf]
  %v2028 = vld [vmem:[%s2008 + $0x4c] sm:$0xf]
  %v2029 = vld [vmem:[%s2008 + $0x50] sm:$0xf]
  %v2030 = vld [vmem:[%s2008 + $0x54] sm:$0xf]
  %v2031 = vld [vmem:[%s2008 + $0x58] sm:$0xf]
  %v2032 = vld [vmem:[%s2008 + $0x5c] sm:$0xf]
  %v2033 = vld [vmem:[%s2008 + $0x60] sm:$0xf]
  %v2034 = vld [vmem:[%s2008 + $0x64] sm:$0xf]
  %v2035 = vld [vmem:[%s2008 + $0x68] sm:$0xf]
  %v2036 = vld [vmem:[%s2008 + $0x6c] sm:$0xf]
  %v2037 = vld [vmem:[%s2008 + $0x70] sm:$0xf]
  %v2038 = vld [vmem:[%s2008 + $0x74] sm:$0xf]
  %v2039 = vld [vmem:[%s2008 + $0x78] sm:$0xf]
  %v2040 = vld [vmem:[%s2008 + $0x7c] sm:$0xf]
  %s2041 = scalar_lea.vmem %s3, 5
  %v2042 = vld [vmem:[%s2041] sm:$0x1]
  %v2044 = vlaneseq
  %v2045 = vshrl.u32 %v2044, 7
  %v2046 = vsub.s32 0, %v2045
  %v2047 = vrot.slane %v2042, %v2046
  %v2081 = vunpack.c.l.b16 %v2009
  %v2082 = vunpack.c.l.b16 %v2010
  %v2083 = vunpack.c.l.b16 %v2011
  %v2084 = vunpack.c.l.b16 %v2012
  %v2085 = vunpack.c.l.b16 %v2013
  %v2086 = vunpack.c.l.b16 %v2014
  %v2087 = vunpack.c.l.b16 %v2015
  %v2088 = vunpack.c.l.b16 %v2016
  %v2089 = vunpack.c.l.b16 %v2017
  %v2090 = vunpack.c.l.b16 %v2018
  %v2091 = vunpack.c.l.b16 %v2019
  %v2092 = vunpack.c.l.b16 %v2020
  %v2093 = vunpack.c.l.b16 %v2021
  %v2094 = vunpack.c.l.b16 %v2022
  %v2095 = vunpack.c.l.b16 %v2023
  %v2096 = vunpack.c.l.b16 %v2024
  %v2097 = vunpack.c.l.b16 %v2025
  %v2098 = vunpack.c.l.b16 %v2026
  %v2099 = vunpack.c.l.b16 %v2027
  %v2100 = vunpack.c.l.b16 %v2028
  %v2101 = vunpack.c.l.b16 %v2029
  %v2102 = vunpack.c.l.b16 %v2030
  %v2103 = vunpack.c.l.b16 %v2031
  %v2104 = vunpack.c.l.b16 %v2032
  %v2105 = vunpack.c.l.b16 %v2033
  %v2106 = vunpack.c.l.b16 %v2034
  %v2107 = vunpack.c.l.b16 %v2035
  %v2108 = vunpack.c.l.b16 %v2036
  %v2109 = vunpack.c.l.b16 %v2037
  %v2110 = vunpack.c.l.b16 %v2038
  %v2111 = vunpack.c.l.b16 %v2039
  %v2112 = vunpack.c.l.b16 %v2040
  %v2113 = vpack.c.b16 %v2082, %v2081
  %v2114 = vpack.c.b16 %v2084, %v2083
  %v2115 = vpack.c.b16 %v2086, %v2085
  %v2116 = vpack.c.b16 %v2088, %v2087
  %v2117 = vpack.c.b16 %v2090, %v2089
  %v2118 = vpack.c.b16 %v2092, %v2091
  %v2119 = vpack.c.b16 %v2094, %v2093
  %v2120 = vpack.c.b16 %v2096, %v2095
  %v2121 = vpack.c.b16 %v2098, %v2097
  %v2122 = vpack.c.b16 %v2100, %v2099
  %v2123 = vpack.c.b16 %v2102, %v2101
  %v2124 = vpack.c.b16 %v2104, %v2103
  %v2125 = vpack.c.b16 %v2106, %v2105
  %v2126 = vpack.c.b16 %v2108, %v2107
  %v2127 = vpack.c.b16 %v2110, %v2109
  %v2128 = vpack.c.b16 %v2112, %v2111
  %2145 = vmatprep.subr.bf16.mxu0 0
  %2146 = vmatpush1.bf16.msra.mxu0 %v2120
  %2147 = vmatprep.subr.bf16.mxu0 0
  %2148 = vmatpush1.bf16.msra.mxu0 %v2119
  %2149 = vmatprep.subr.bf16.mxu0 0
  %2150 = vmatpush1.bf16.msra.mxu0 %v2118
  %2151 = vmatprep.subr.bf16.mxu0 0
  %2152 = vmatpush1.bf16.msra.mxu0 %v2117
  %2153 = vmatprep.subr.bf16.mxu0 0
  %2154 = vmatpush1.bf16.msra.mxu0 %v2116
  %2155 = vmatprep.subr.bf16.mxu0 0
  %2156 = vmatpush1.bf16.msra.mxu0 %v2115
  %2157 = vmatprep.subr.bf16.mxu0 0
  %2158 = vmatpush1.bf16.msra.mxu0 %v2114
  %2159 = vmatprep.subr.bf16.mxu0 0
  %2160 = vmatpush1.bf16.msra.mxu0 %v2113
  %2161 = vmatprep.subr.bf16.mxu0 0
  %2162 = vmatpush2.bf16.msra.mxu0 %v2128
  %2163 = vmatprep.subr.bf16.mxu0 0
  %2164 = vmatpush2.bf16.msra.mxu0 %v2127
  %2165 = vmatprep.subr.bf16.mxu0 0
  %2166 = vmatpush2.bf16.msra.mxu0 %v2126
  %2167 = vmatprep.subr.bf16.mxu0 0
  %2168 = vmatpush2.bf16.msra.mxu0 %v2125
  %2169 = vmatprep.subr.bf16.mxu0 0
  %2170 = vmatpush2.bf16.msra.mxu0 %v2124
  %2171 = vmatprep.subr.bf16.mxu0 0
  %2172 = vmatpush2.bf16.msra.mxu0 %v2123
  %2173 = vmatprep.subr.bf16.mxu0 0
  %2174 = vmatpush2.bf16.msra.mxu0 %v2122
  %2175 = vmatprep.subr.bf16.mxu0 0
  %2176 = vmatpush2.bf16.msra.mxu0 %v2121
  %2177 = vmatprep.mubr.bf16.mxu0 %v2000
  %2178 = vmatmul.mubr.bf16.gmra.mxu0 %v1895
  %v2179 = vpop.f32.mrf.mxu0
  %v2180 = vadd.f32 %v2047, %v2179
  %v2181 = vpop.f32.mrf.mxu0
  %v2182 = vpop.f32.mrf.mxu0
  %v2183 = vadd.f32 %v2047, %v2182
  %v2184 = vpop.f32.mrf.mxu0
  %2185 = vmatprep.mubr.bf16.mxu0 %v2001
  %2186 = vmatmul.mubr.bf16.gmra.mxu0 %v1896
  %v2187 = vpop.f32.mrf.mxu0
  %v2188 = vadd.f32 %v2047, %v2187
  %v2189 = vpop.f32.mrf.mxu0
  %v2190 = vpop.f32.mrf.mxu0
  %v2191 = vadd.f32 %v2047, %v2190
  %v2192 = vpop.f32.mrf.mxu0
  %2193 = vmatprep.mubr.bf16.mxu0 %v2002
  %2194 = vmatmul.mubr.bf16.gmra.mxu0 %v1897
  %v2195 = vpop.f32.mrf.mxu0
  %v2196 = vadd.f32 %v2047, %v2195
  %v2197 = vpop.f32.mrf.mxu0
  %v2198 = vpop.f32.mrf.mxu0
  %v2199 = vadd.f32 %v2047, %v2198
  %v2200 = vpop.f32.mrf.mxu0
  %2201 = vmatprep.mubr.bf16.mxu0 %v2003
  %2202 = vmatmul.mubr.bf16.gmra.mxu0 %v1898
  %v2203 = vpop.f32.mrf.mxu0
  %v2204 = vadd.f32 %v2047, %v2203
  %v2205 = vpop.f32.mrf.mxu0
  %v2206 = vpop.f32.mrf.mxu0
  %v2207 = vadd.f32 %v2047, %v2206
  %v2208 = vpop.f32.mrf.mxu0
  %2209 = vmatprep.mubr.bf16.mxu0 %v2004
  %2210 = vmatmul.mubr.bf16.gmra.mxu0 %v1899
  %v2211 = vpop.f32.mrf.mxu0
  %v2212 = vadd.f32 %v2047, %v2211
  %v2213 = vpop.f32.mrf.mxu0
  %v2214 = vpop.f32.mrf.mxu0
  %v2215 = vadd.f32 %v2047, %v2214
  %v2216 = vpop.f32.mrf.mxu0
  %2217 = vmatprep.mubr.bf16.mxu0 %v2005
  %2218 = vmatmul.mubr.bf16.gmra.mxu0 %v1900
  %v2219 = vpop.f32.mrf.mxu0
  %v2220 = vadd.f32 %v2047, %v2219
  %v2221 = vpop.f32.mrf.mxu0
  %v2222 = vpop.f32.mrf.mxu0
  %v2223 = vadd.f32 %v2047, %v2222
  %v2224 = vpop.f32.mrf.mxu0
  %2225 = vmatprep.mubr.bf16.mxu0 %v2006
  %2226 = vmatmul.mubr.bf16.gmra.mxu0 %v1901
  %v2227 = vpop.f32.mrf.mxu0
  %v2228 = vadd.f32 %v2047, %v2227
  %v2229 = vpop.f32.mrf.mxu0
  %v2230 = vpop.f32.mrf.mxu0
  %v2231 = vadd.f32 %v2047, %v2230
  %v2232 = vpop.f32.mrf.mxu0
  %2233 = vmatprep.mubr.bf16.mxu0 %v2007
  %2234 = vmatmul.mubr.bf16.gmra.mxu0 %v1902
  %v2235 = vpop.f32.mrf.mxu0
  %v2236 = vadd.f32 %v2047, %v2235
  %v2237 = vpop.f32.mrf.mxu0
  %v2238 = vpop.f32.mrf.mxu0
  %v2239 = vadd.f32 %v2047, %v2238
  %v2240 = vpop.f32.mrf.mxu0
  %2241 = vdwg.mxu0
  %v2242 = vmax.f32 %v2180, 0.0
  %v2243 = vmax.f32 %v2183, 0.0
  %v2244 = vmax.f32 %v2188, 0.0
  %v2245 = vmax.f32 %v2191, 0.0
  %v2246 = vmax.f32 %v2196, 0.0
  %v2247 = vmax.f32 %v2199, 0.0
  %v2248 = vmax.f32 %v2204, 0.0
  %v2249 = vmax.f32 %v2207, 0.0
  %v2250 = vmax.f32 %v2212, 0.0
  %v2251 = vmax.f32 %v2215, 0.0
  %v2252 = vmax.f32 %v2220, 0.0
  %v2253 = vmax.f32 %v2223, 0.0
  %v2254 = vmax.f32 %v2228, 0.0
  %v2255 = vmax.f32 %v2231, 0.0
  %v2256 = vmax.f32 %v2236, 0.0
  %v2257 = vmax.f32 %v2239, 0.0
  %v2258 = vpack.c.bf16 %v2243, %v2242
  %v2259 = vpack.c.bf16 %v2245, %v2244
  %v2260 = vpack.c.bf16 %v2247, %v2246
  %v2261 = vpack.c.bf16 %v2249, %v2248
  %v2262 = vpack.c.bf16 %v2251, %v2250
  %v2263 = vpack.c.bf16 %v2253, %v2252
  %v2264 = vpack.c.bf16 %v2255, %v2254
  %v2265 = vpack.c.bf16 %v2257, %v2256
  %2266 = vmatprep.subr.bf16.mxu0 0
  %2267 = vmatpush1.bf16.msra.mxu0 %v2265
  %2268 = vmatprep.subr.bf16.mxu0 0
  %2269 = vmatpush1.bf16.msra.mxu0 %v2264
  %2270 = vmatprep.subr.bf16.mxu0 0
  %2271 = vmatpush1.bf16.msra.mxu0 %v2263
  %2272 = vmatprep.subr.bf16.mxu0 0
  %2273 = vmatpush1.bf16.msra.mxu0 %v2262
  %2274 = vmatprep.subr.bf16.mxu0 0
  %2275 = vmatpush1.bf16.msra.mxu0 %v2261
  %2276 = vmatprep.subr.bf16.mxu0 0
  %2277 = vmatpush1.bf16.msra.mxu0 %v2260
  %2278 = vmatprep.subr.bf16.mxu0 0
  %2279 = vmatpush1.bf16.msra.mxu0 %v2259
  %2280 = vmatprep.subr.bf16.mxu0 0
  %2281 = vmatpush1.bf16.msra.mxu0 %v2258
  %2282 = vmatprep.subr.bf16.mxu0 0
  %2283 = vmatpush2.bf16.msra.mxu0 0
  %2284 = vmatprep.subr.bf16.mxu0 0
  %2285 = vmatpush2.bf16.msra.mxu0 0
  %2286 = vmatprep.subr.bf16.mxu0 0
  %2287 = vmatpush2.bf16.msra.mxu0 0
  %2288 = vmatprep.subr.bf16.mxu0 0
  %2289 = vmatpush2.bf16.msra.mxu0 0
  %2290 = vmatprep.subr.bf16.mxu0 0
  %2291 = vmatpush2.bf16.msra.mxu0 0
  %2292 = vmatprep.subr.bf16.mxu0 0
  %2293 = vmatpush2.bf16.msra.mxu0 0
  %2294 = vmatprep.subr.bf16.mxu0 0
  %2295 = vmatpush2.bf16.msra.mxu0 0
  %2296 = vmatprep.subr.bf16.mxu0 0
  %2297 = vmatpush2.bf16.msra.mxu0 0
  %2298 = vmatprep.mubr.bf16.mxu0 0
  %2299 = vmatmul.mubr.bf16.gmra.mxu0 %v90
  %v2300 = vpop.f32.mrf.mxu0
  %v2301 = vadd.f32 0.0, %v2300
  %v2302 = vpop.f32.mrf.mxu0
  %v2303 = vpop.f32.mrf.mxu0
  %v2304 = vadd.f32 0.0, %v2303
  %v2305 = vpop.f32.mrf.mxu0
  %2306 = vmatprep.mubr.bf16.mxu0 0
  %2307 = vmatmul.mubr.bf16.gmra.mxu0 %v91
  %v2308 = vpop.f32.mrf.mxu0
  %v2309 = vadd.f32 0.0, %v2308
  %v2310 = vpop.f32.mrf.mxu0
  %v2311 = vpop.f32.mrf.mxu0
  %v2312 = vadd.f32 0.0, %v2311
  %v2313 = vpop.f32.mrf.mxu0
  %2314 = vmatprep.mubr.bf16.mxu0 0
  %2315 = vmatmul.mubr.bf16.gmra.mxu0 %v92
  %v2316 = vpop.f32.mrf.mxu0
  %v2317 = vadd.f32 0.0, %v2316
  %v2318 = vpop.f32.mrf.mxu0
  %v2319 = vpop.f32.mrf.mxu0
  %v2320 = vadd.f32 0.0, %v2319
  %v2321 = vpop.f32.mrf.mxu0
  %2322 = vmatprep.mubr.bf16.mxu0 0
  %2323 = vmatmul.mubr.bf16.gmra.mxu0 %v93
  %v2324 = vpop.f32.mrf.mxu0
  %v2325 = vadd.f32 0.0, %v2324
  %v2326 = vpop.f32.mrf.mxu0
  %v2327 = vpop.f32.mrf.mxu0
  %v2328 = vadd.f32 0.0, %v2327
  %v2329 = vpop.f32.mrf.mxu0
  %2330 = vmatprep.mubr.bf16.mxu0 0
  %2331 = vmatmul.mubr.bf16.gmra.mxu0 %v94
  %v2332 = vpop.f32.mrf.mxu0
  %v2333 = vadd.f32 0.0, %v2332
  %v2334 = vpop.f32.mrf.mxu0
  %v2335 = vpop.f32.mrf.mxu0
  %v2336 = vadd.f32 0.0, %v2335
  %v2337 = vpop.f32.mrf.mxu0
  %2338 = vmatprep.mubr.bf16.mxu0 0
  %2339 = vmatmul.mubr.bf16.gmra.mxu0 %v95
  %v2340 = vpop.f32.mrf.mxu0
  %v2341 = vadd.f32 0.0, %v2340
  %v2342 = vpop.f32.mrf.mxu0
  %v2343 = vpop.f32.mrf.mxu0
  %v2344 = vadd.f32 0.0, %v2343
  %v2345 = vpop.f32.mrf.mxu0
  %2346 = vmatprep.mubr.bf16.mxu0 0
  %2347 = vmatmul.mubr.bf16.gmra.mxu0 %v96
  %v2348 = vpop.f32.mrf.mxu0
  %v2349 = vadd.f32 0.0, %v2348
  %v2350 = vpop.f32.mrf.mxu0
  %v2351 = vpop.f32.mrf.mxu0
  %v2352 = vadd.f32 0.0, %v2351
  %v2353 = vpop.f32.mrf.mxu0
  %2354 = vmatprep.mubr.bf16.mxu0 0
  %2355 = vmatmul.mubr.bf16.gmra.mxu0 %v97
  %v2356 = vpop.f32.mrf.mxu0
  %v2357 = vadd.f32 0.0, %v2356
  %v2358 = vpop.f32.mrf.mxu0
  %v2359 = vpop.f32.mrf.mxu0
  %v2360 = vadd.f32 0.0, %v2359
  %v2361 = vpop.f32.mrf.mxu0
  %2362 = vdwg.mxu0
  %v2363 = vpack.c.bf16 %v2304, %v2301
  %v2364 = vpack.c.bf16 %v2312, %v2309
  %v2365 = vpack.c.bf16 %v2320, %v2317
  %v2366 = vpack.c.bf16 %v2328, %v2325
  %v2367 = vpack.c.bf16 %v2336, %v2333
  %v2368 = vpack.c.bf16 %v2344, %v2341
  %v2369 = vpack.c.bf16 %v2352, %v2349
  %v2370 = vpack.c.bf16 %v2360, %v2357
  %s2371 = scalar_lea.vmem %s2, 768
  %v2372 = vld [vmem:[%s2371] sm:$0xf]
  %v2373 = vld [vmem:[%s2371 + $0x4] sm:$0xf]
  %v2374 = vld [vmem:[%s2371 + $0x8] sm:$0xf]
  %v2375 = vld [vmem:[%s2371 + $0xc] sm:$0xf]
  %v2376 = vld [vmem:[%s2371 + $0x10] sm:$0xf]
  %v2377 = vld [vmem:[%s2371 + $0x14] sm:$0xf]
  %v2378 = vld [vmem:[%s2371 + $0x18] sm:$0xf]
  %v2379 = vld [vmem:[%s2371 + $0x1c] sm:$0xf]
  %v2380 = vld [vmem:[%s2371 + $0x20] sm:$0xf]
  %v2381 = vld [vmem:[%s2371 + $0x24] sm:$0xf]
  %v2382 = vld [vmem:[%s2371 + $0x28] sm:$0xf]
  %v2383 = vld [vmem:[%s2371 + $0x2c] sm:$0xf]
  %v2384 = vld [vmem:[%s2371 + $0x30] sm:$0xf]
  %v2385 = vld [vmem:[%s2371 + $0x34] sm:$0xf]
  %v2386 = vld [vmem:[%s2371 + $0x38] sm:$0xf]
  %v2387 = vld [vmem:[%s2371 + $0x3c] sm:$0xf]
  %v2388 = vld [vmem:[%s2371 + $0x40] sm:$0xf]
  %v2389 = vld [vmem:[%s2371 + $0x44] sm:$0xf]
  %v2390 = vld [vmem:[%s2371 + $0x48] sm:$0xf]
  %v2391 = vld [vmem:[%s2371 + $0x4c] sm:$0xf]
  %v2392 = vld [vmem:[%s2371 + $0x50] sm:$0xf]
  %v2393 = vld [vmem:[%s2371 + $0x54] sm:$0xf]
  %v2394 = vld [vmem:[%s2371 + $0x58] sm:$0xf]
  %v2395 = vld [vmem:[%s2371 + $0x5c] sm:$0xf]
  %v2396 = vld [vmem:[%s2371 + $0x60] sm:$0xf]
  %v2397 = vld [vmem:[%s2371 + $0x64] sm:$0xf]
  %v2398 = vld [vmem:[%s2371 + $0x68] sm:$0xf]
  %v2399 = vld [vmem:[%s2371 + $0x6c] sm:$0xf]
  %v2400 = vld [vmem:[%s2371 + $0x70] sm:$0xf]
  %v2401 = vld [vmem:[%s2371 + $0x74] sm:$0xf]
  %v2402 = vld [vmem:[%s2371 + $0x78] sm:$0xf]
  %v2403 = vld [vmem:[%s2371 + $0x7c] sm:$0xf]
  %s2404 = scalar_lea.vmem %s3, 6
  %v2405 = vld [vmem:[%s2404] sm:$0x1]
  %v2407 = vlaneseq
  %v2408 = vshrl.u32 %v2407, 7
  %v2409 = vsub.s32 0, %v2408
  %v2410 = vrot.slane %v2405, %v2409
  %v2444 = vunpack.c.l.b16 %v2372
  %v2445 = vunpack.c.l.b16 %v2373
  %v2446 = vunpack.c.l.b16 %v2374
  %v2447 = vunpack.c.l.b16 %v2375
  %v2448 = vunpack.c.l.b16 %v2376
  %v2449 = vunpack.c.l.b16 %v2377
  %v2450 = vunpack.c.l.b16 %v2378
  %v2451 = vunpack.c.l.b16 %v2379
  %v2452 = vunpack.c.l.b16 %v2380
  %v2453 = vunpack.c.l.b16 %v2381
  %v2454 = vunpack.c.l.b16 %v2382
  %v2455 = vunpack.c.l.b16 %v2383
  %v2456 = vunpack.c.l.b16 %v2384
  %v2457 = vunpack.c.l.b16 %v2385
  %v2458 = vunpack.c.l.b16 %v2386
  %v2459 = vunpack.c.l.b16 %v2387
  %v2460 = vunpack.c.l.b16 %v2388
  %v2461 = vunpack.c.l.b16 %v2389
  %v2462 = vunpack.c.l.b16 %v2390
  %v2463 = vunpack.c.l.b16 %v2391
  %v2464 = vunpack.c.l.b16 %v2392
  %v2465 = vunpack.c.l.b16 %v2393
  %v2466 = vunpack.c.l.b16 %v2394
  %v2467 = vunpack.c.l.b16 %v2395
  %v2468 = vunpack.c.l.b16 %v2396
  %v2469 = vunpack.c.l.b16 %v2397
  %v2470 = vunpack.c.l.b16 %v2398
  %v2471 = vunpack.c.l.b16 %v2399
  %v2472 = vunpack.c.l.b16 %v2400
  %v2473 = vunpack.c.l.b16 %v2401
  %v2474 = vunpack.c.l.b16 %v2402
  %v2475 = vunpack.c.l.b16 %v2403
  %v2476 = vpack.c.b16 %v2445, %v2444
  %v2477 = vpack.c.b16 %v2447, %v2446
  %v2478 = vpack.c.b16 %v2449, %v2448
  %v2479 = vpack.c.b16 %v2451, %v2450
  %v2480 = vpack.c.b16 %v2453, %v2452
  %v2481 = vpack.c.b16 %v2455, %v2454
  %v2482 = vpack.c.b16 %v2457, %v2456
  %v2483 = vpack.c.b16 %v2459, %v2458
  %v2484 = vpack.c.b16 %v2461, %v2460
  %v2485 = vpack.c.b16 %v2463, %v2462
  %v2486 = vpack.c.b16 %v2465, %v2464
  %v2487 = vpack.c.b16 %v2467, %v2466
  %v2488 = vpack.c.b16 %v2469, %v2468
  %v2489 = vpack.c.b16 %v2471, %v2470
  %v2490 = vpack.c.b16 %v2473, %v2472
  %v2491 = vpack.c.b16 %v2475, %v2474
  %2508 = vmatprep.subr.bf16.mxu0 0
  %2509 = vmatpush1.bf16.msra.mxu0 %v2483
  %2510 = vmatprep.subr.bf16.mxu0 0
  %2511 = vmatpush1.bf16.msra.mxu0 %v2482
  %2512 = vmatprep.subr.bf16.mxu0 0
  %2513 = vmatpush1.bf16.msra.mxu0 %v2481
  %2514 = vmatprep.subr.bf16.mxu0 0
  %2515 = vmatpush1.bf16.msra.mxu0 %v2480
  %2516 = vmatprep.subr.bf16.mxu0 0
  %2517 = vmatpush1.bf16.msra.mxu0 %v2479
  %2518 = vmatprep.subr.bf16.mxu0 0
  %2519 = vmatpush1.bf16.msra.mxu0 %v2478
  %2520 = vmatprep.subr.bf16.mxu0 0
  %2521 = vmatpush1.bf16.msra.mxu0 %v2477
  %2522 = vmatprep.subr.bf16.mxu0 0
  %2523 = vmatpush1.bf16.msra.mxu0 %v2476
  %2524 = vmatprep.subr.bf16.mxu0 0
  %2525 = vmatpush2.bf16.msra.mxu0 %v2491
  %2526 = vmatprep.subr.bf16.mxu0 0
  %2527 = vmatpush2.bf16.msra.mxu0 %v2490
  %2528 = vmatprep.subr.bf16.mxu0 0
  %2529 = vmatpush2.bf16.msra.mxu0 %v2489
  %2530 = vmatprep.subr.bf16.mxu0 0
  %2531 = vmatpush2.bf16.msra.mxu0 %v2488
  %2532 = vmatprep.subr.bf16.mxu0 0
  %2533 = vmatpush2.bf16.msra.mxu0 %v2487
  %2534 = vmatprep.subr.bf16.mxu0 0
  %2535 = vmatpush2.bf16.msra.mxu0 %v2486
  %2536 = vmatprep.subr.bf16.mxu0 0
  %2537 = vmatpush2.bf16.msra.mxu0 %v2485
  %2538 = vmatprep.subr.bf16.mxu0 0
  %2539 = vmatpush2.bf16.msra.mxu0 %v2484
  %2540 = vmatprep.mubr.bf16.mxu0 %v2363
  %2541 = vmatmul.mubr.bf16.gmra.mxu0 %v2258
  %v2542 = vpop.f32.mrf.mxu0
  %v2543 = vadd.f32 %v2410, %v2542
  %v2544 = vpop.f32.mrf.mxu0
  %v2545 = vpop.f32.mrf.mxu0
  %v2546 = vadd.f32 %v2410, %v2545
  %v2547 = vpop.f32.mrf.mxu0
  %2548 = vmatprep.mubr.bf16.mxu0 %v2364
  %2549 = vmatmul.mubr.bf16.gmra.mxu0 %v2259
  %v2550 = vpop.f32.mrf.mxu0
  %v2551 = vadd.f32 %v2410, %v2550
  %v2552 = vpop.f32.mrf.mxu0
  %v2553 = vpop.f32.mrf.mxu0
  %v2554 = vadd.f32 %v2410, %v2553
  %v2555 = vpop.f32.mrf.mxu0
  %2556 = vmatprep.mubr.bf16.mxu0 %v2365
  %2557 = vmatmul.mubr.bf16.gmra.mxu0 %v2260
  %v2558 = vpop.f32.mrf.mxu0
  %v2559 = vadd.f32 %v2410, %v2558
  %v2560 = vpop.f32.mrf.mxu0
  %v2561 = vpop.f32.mrf.mxu0
  %v2562 = vadd.f32 %v2410, %v2561
  %v2563 = vpop.f32.mrf.mxu0
  %2564 = vmatprep.mubr.bf16.mxu0 %v2366
  %2565 = vmatmul.mubr.bf16.gmra.mxu0 %v2261
  %v2566 = vpop.f32.mrf.mxu0
  %v2567 = vadd.f32 %v2410, %v2566
  %v2568 = vpop.f32.mrf.mxu0
  %v2569 = vpop.f32.mrf.mxu0
  %v2570 = vadd.f32 %v2410, %v2569
  %v2571 = vpop.f32.mrf.mxu0
  %2572 = vmatprep.mubr.bf16.mxu0 %v2367
  %2573 = vmatmul.mubr.bf16.gmra.mxu0 %v2262
  %v2574 = vpop.f32.mrf.mxu0
  %v2575 = vadd.f32 %v2410, %v2574
  %v2576 = vpop.f32.mrf.mxu0
  %v2577 = vpop.f32.mrf.mxu0
  %v2578 = vadd.f32 %v2410, %v2577
  %v2579 = vpop.f32.mrf.mxu0
  %2580 = vmatprep.mubr.bf16.mxu0 %v2368
  %2581 = vmatmul.mubr.bf16.gmra.mxu0 %v2263
  %v2582 = vpop.f32.mrf.mxu0
  %v2583 = vadd.f32 %v2410, %v2582
  %v2584 = vpop.f32.mrf.mxu0
  %v2585 = vpop.f32.mrf.mxu0
  %v2586 = vadd.f32 %v2410, %v2585
  %v2587 = vpop.f32.mrf.mxu0
  %2588 = vmatprep.mubr.bf16.mxu0 %v2369
  %2589 = vmatmul.mubr.bf16.gmra.mxu0 %v2264
  %v2590 = vpop.f32.mrf.mxu0
  %v2591 = vadd.f32 %v2410, %v2590
  %v2592 = vpop.f32.mrf.mxu0
  %v2593 = vpop.f32.mrf.mxu0
  %v2594 = vadd.f32 %v2410, %v2593
  %v2595 = vpop.f32.mrf.mxu0
  %2596 = vmatprep.mubr.bf16.mxu0 %v2370
  %2597 = vmatmul.mubr.bf16.gmra.mxu0 %v2265
  %v2598 = vpop.f32.mrf.mxu0
  %v2599 = vadd.f32 %v2410, %v2598
  %v2600 = vpop.f32.mrf.mxu0
  %v2601 = vpop.f32.mrf.mxu0
  %v2602 = vadd.f32 %v2410, %v2601
  %v2603 = vpop.f32.mrf.mxu0
  %2604 = vdwg.mxu0
  %v2605 = vlaneseq
  %v2606 = vand.u32 %v2605, 127
  %vm2607 = vcmp.ge.s32.totalorder %v2606, 32
  %vm2608 = vcmp.lt.s32.totalorder %v2606, 35
  %vm2609 = vmand %vm2607, %vm2608
  %v2610 = vadd.f32 %v1470, %v2543
  %v2611 = vadd.f32 %v1473, %v2546
  %v2612 = vadd.f32 %v1478, %v2551
  %v2613 = vadd.f32 %v1481, %v2554
  %v2614 = vadd.f32 %v1486, %v2559
  %v2615 = vadd.f32 %v1489, %v2562
  %v2616 = vadd.f32 %v1494, %v2567
  %v2617 = vadd.f32 %v1497, %v2570
  %v2618 = vadd.f32 %v1502, %v2575
  %v2619 = vadd.f32 %v1505, %v2578
  %v2620 = vadd.f32 %v1510, %v2583
  %v2621 = vadd.f32 %v1513, %v2586
  %v2622 = vadd.f32 %v1518, %v2591
  %v2623 = vadd.f32 %v1521, %v2594
  %v2624 = vadd.f32 %v1526, %v2599
  %v2625 = vadd.f32 %v1529, %v2602
  %v2626 = vsel %vm2609, %v18, 0.0
  %v2627 = vsel %vm2609, %v19, 0.0
  %v2628 = vsel %vm2609, %v20, 0.0
  %v2629 = vsel %vm2609, %v21, 0.0
  %v2630 = vsel %vm2609, %v22, 0.0
  %v2631 = vsel %vm2609, %v23, 0.0
  %v2632 = vsel %vm2609, %v24, 0.0
  %v2633 = vsel %vm2609, %v25, 0.0
  %v2634 = vsel %vm2609, %v26, 0.0
  %v2635 = vsel %vm2609, %v27, 0.0
  %v2636 = vsel %vm2609, %v28, 0.0
  %v2637 = vsel %vm2609, %v29, 0.0
  %v2638 = vsel %vm2609, %v30, 0.0
  %v2639 = vsel %vm2609, %v31, 0.0
  %v2640 = vsel %vm2609, %v32, 0.0
  %v2641 = vsel %vm2609, %v33, 0.0
  %v2642 = vadd.f32 %v2610, %v2626
  %v2643 = vadd.f32 %v2611, %v2627
  %v2644 = vadd.f32 %v2612, %v2628
  %v2645 = vadd.f32 %v2613, %v2629
  %v2646 = vadd.f32 %v2614, %v2630
  %v2647 = vadd.f32 %v2615, %v2631
  %v2648 = vadd.f32 %v2616, %v2632
  %v2649 = vadd.f32 %v2617, %v2633
  %v2650 = vadd.f32 %v2618, %v2634
  %v2651 = vadd.f32 %v2619, %v2635
  %v2652 = vadd.f32 %v2620, %v2636
  %v2653 = vadd.f32 %v2621, %v2637
  %v2654 = vadd.f32 %v2622, %v2638
  %v2655 = vadd.f32 %v2623, %v2639
  %v2656 = vadd.f32 %v2624, %v2640
  %v2657 = vadd.f32 %v2625, %v2641
  %2658 = vst [vmem:[%s4] sm:$0xff] %v2642
  %2659 = vst [vmem:[%s4 + $0x8] sm:$0xff] %v2643
  %2660 = vst [vmem:[%s4 + $0x10] sm:$0xff] %v2644
  %2661 = vst [vmem:[%s4 + $0x18] sm:$0xff] %v2645
  %2662 = vst [vmem:[%s4 + $0x20] sm:$0xff] %v2646
  %2663 = vst [vmem:[%s4 + $0x28] sm:$0xff] %v2647
  %2664 = vst [vmem:[%s4 + $0x30] sm:$0xff] %v2648
  %2665 = vst [vmem:[%s4 + $0x38] sm:$0xff] %v2649
  %2666 = vst [vmem:[%s4 + $0x40] sm:$0xff] %v2650
  %2667 = vst [vmem:[%s4 + $0x48] sm:$0xff] %v2651
  %2668 = vst [vmem:[%s4 + $0x50] sm:$0xff] %v2652
  %2669 = vst [vmem:[%s4 + $0x58] sm:$0xff] %v2653
  %2670 = vst [vmem:[%s4 + $0x60] sm:$0xff] %v2654
  %2671 = vst [vmem:[%s4 + $0x68] sm:$0xff] %v2655
  %2672 = vst [vmem:[%s4 + $0x70] sm:$0xff] %v2656
  %2673 = vst [vmem:[%s4 + $0x78] sm:$0xff] %v2657
  // Predicated region
  $region18: #{mat_deform_forward.1} parent=0 // pred_check
    _
  $region19: #{mat_deform_forward.1} parent=0 // pred_check_branch
    %2675 = sbr.rel (0) target = $region21
  $region20: #{mat_deform_forward.1} parent=0 // pred_region
    _
  $region21: #{mat_deform_forward.1} parent=0 // pred_fallthru
    _
  // Predicated region
  $region22: #{mat_deform_forward.1} parent=0 // pred_check
    _
  $region23: #{mat_deform_forward.1} parent=0 // pred_check_branch
    %2677 = sbr.rel (0) target = $region25
  $region24: #{mat_deform_forward.1} parent=0 // pred_region
    _
  $region25: #{mat_deform_forward.1} parent=0 // pred_fallthru
    _

</llo_original>
